<compile_context>
chip_gen: v7x
topology: tpu7x:2x2x1
jax: 0.10.0
libtpu: 0.0.40
codegen_flags: <defaults>
</compile_context>

<pallas_src>
import jax
import jax.numpy as jnp
from jax.experimental import pallas as pl
from jax.experimental.pallas import tpu as pltpu


def _round_up(x, m):
    return ((x + m - 1) // m) * m


def _cdiv(a, b):
    return -(-a // b)


def _pick_row_tiling(rows, tm_max=256, min_tiles=2):
    """Row tile (multiple of 16 for bf16 sublanes) with minimal zero padding; keep at least
    `min_tiles` row tiles so the 'parallel' axis can shard across v7x's two TensorCores."""
    rows16 = _round_up(rows, 16)
    n_tiles = max(min_tiles, _cdiv(rows16, tm_max))
    tm = _round_up(_cdiv(rows, n_tiles), 16)
    return tm, tm * n_tiles


# ----------------------------------------------------------------------------- kernel ----
def _bgc_kernel(adj_ref, feat_ref, base_ref, w1_ref, b1_ref, w2_ref, b2_ref,
                temp_ref, out_ref):
    # conv_output for this row tile: bf16 MXU matmul, f32 accumulation.
    conv = jnp.dot(adj_ref[...], feat_ref[...], preferred_element_type=jnp.float32)
    t = temp_ref[0]                              # signed temp scalar (SMEM)
    # base already carries + t*vec (folded on host): h = base + t*(vec - conv_output).
    h = base_ref[...] - t * conv
    h1 = jnp.dot(h.astype(jnp.bfloat16), w1_ref[...],
                 preferred_element_type=jnp.float32) + b1_ref[...]
    h1 = jnp.maximum(h1, 0.0)
    out_ref[...] = jnp.dot(h1.astype(jnp.bfloat16), w2_ref[...],
                           preferred_element_type=jnp.float32) + b2_ref[...]


def _run_kernel(adj, feat, base, w1, b1, w2, b2, signed_temp, tm):
    rows_pad, cols_pad = adj.shape
    emb_pad = base.shape[1]
    grid = (rows_pad // tm,)

    # VMEM budget from tile sizes (BlockSpec double-buffers each input by default).
    # TODO(synk): mark the constant-index-map residents (feat, w1, b1, w2, b2) as
    # pipeline_mode=pl.Buffered(1) once single-buffering is needed (VMEM is not binding here).
    vmem_bytes = (
        2 * tm * cols_pad * 2                 # adj row slab (bf16), double buffered
        + 2 * cols_pad * emb_pad * 2          # feat (bf16), resident
        + 2 * tm * emb_pad * 4                # base tile (f32)
        + 2 * 2 * emb_pad * emb_pad * 2       # w1, w2 (bf16), resident
        + 2 * 2 * emb_pad * 4                 # b1, b2 (f32)
        + 2 * tm * emb_pad * 4)               # out tile (f32)
    vmem_limit = int(min(max(2 * vmem_bytes, 16 * 1024 * 1024), 48 * 1024 * 1024))

    return pl.pallas_call(
        _bgc_kernel,
        out_shape=jax.ShapeDtypeStruct((rows_pad, emb_pad), jnp.float32),
        grid_spec=pltpu.PrefetchScalarGridSpec(
            num_scalar_prefetch=0,
            grid=grid,
            in_specs=[
                pl.BlockSpec((tm, cols_pad), lambda i: (i, 0)),          # adj row slab
                pl.BlockSpec((cols_pad, emb_pad), lambda i: (0, 0)),     # feat (resident)
                pl.BlockSpec((tm, emb_pad), lambda i: (i, 0)),           # fused base rows
                pl.BlockSpec((emb_pad, emb_pad), lambda i: (0, 0)),      # w1 (resident, bf16)
                pl.BlockSpec((1, emb_pad), lambda i: (0, 0)),            # b1 (resident)
                pl.BlockSpec((emb_pad, emb_pad), lambda i: (0, 0)),      # w2 (resident, bf16)
                pl.BlockSpec((1, emb_pad), lambda i: (0, 0)),            # b2 (resident)
                pl.BlockSpec(memory_space=pltpu.SMEM),                   # signed temp
            ],
            out_specs=pl.BlockSpec((tm, emb_pad), lambda i: (i, 0)),
        ),
        compiler_params=pltpu.CompilerParams(
            dimension_semantics=("parallel",),
            vmem_limit_bytes=vmem_limit),
    )(adj, feat, base, w1, b1, w2, b2, signed_temp)


# --------------------------------------------------------------------------- wrapper -----
def build_dense_adj(edge_index, edge_weight, n_rows, n_cols):
    """Dense equivalent of build_adj_*: coalesce (scatter-add duplicates) then scale every
    value by 1 / clamp(sum(all edge_weights), min=1) (global scalar, as in the reference)."""
    rows = edge_index[:, 0]
    cols = edge_index[:, 1]
    norm = 1.0 / jnp.maximum(jnp.sum(edge_weight), 1.0)
    adj = jnp.zeros((n_rows, n_cols), jnp.float32).at[rows, cols].add(edge_weight)
    return adj * norm


def _decompose(left_features, right_features_k, right_features, c, b, temp, right_to_left):
    n, m = c.shape[0], b.shape[0]
    if right_to_left:
        rows, cols = m, n
        feat = 2.0 * right_features - right_features_k
        base, vec = left_features, b
        signed_temp = (-temp[0:1]).astype(jnp.float32)
    else:
        rows, cols = n, m
        feat = left_features
        base, vec = right_features, c
        signed_temp = temp[1:2].astype(jnp.float32)
    return rows, cols, feat, base, vec, signed_temp


def bipartite_graph_convolution(left_features, right_features_k, edge_index,
                                edge_weight, right_features, c, b, params,
                                right_to_left=False, tm_max=256):
    """params = dict(w1 (emb,emb), b1 (1,emb), w2 (emb,emb), b2 (1,emb), temp (2,))"""
    emb = right_features.shape[1]
    w1, b1, w2, b2, temp = (params["w1"], params["b1"], params["w2"],
                            params["b2"], params["temp"])
    rows, cols, feat, base, vec, signed_temp = _decompose(
        left_features, right_features_k, right_features, c, b, temp, right_to_left)

    # Lane-dense / tileable padding (zero padding is exact through matmuls + ReLU).
    emb_pad = _round_up(emb, 128)
    tm, rows_pad = _pick_row_tiling(rows, tm_max)
    cols_pad = _round_up(cols, 128)

    # Dense, globally-normalized adjacency built directly at padded shape (scatter in f32,
    # then cast); bf16 halves the dominant HBM read, accumulation stays f32 in the kernel.
    norm = 1.0 / jnp.maximum(jnp.sum(edge_weight), 1.0)
    adj = (jnp.zeros((rows_pad, cols_pad), jnp.float32)
           .at[edge_index[:, 0], edge_index[:, 1]].add(edge_weight) * norm
           ).astype(jnp.bfloat16)

    feat_p = jnp.zeros((cols_pad, emb_pad), jnp.bfloat16).at[:cols, :emb].set(
        feat.astype(jnp.bfloat16))
    # Fold vec into base: base' = base + signed_temp * vec  (so kernel does base' - t*conv).
    base_fused = base + signed_temp * vec
    base_p = jnp.zeros((rows_pad, emb_pad), jnp.float32).at[:rows, :emb].set(base_fused)
    w1_p = jnp.zeros((emb_pad, emb_pad), jnp.bfloat16).at[:emb, :emb].set(
        w1.astype(jnp.bfloat16))
    w2_p = jnp.zeros((emb_pad, emb_pad), jnp.bfloat16).at[:emb, :emb].set(
        w2.astype(jnp.bfloat16))
    b1_p = jnp.zeros((1, emb_pad), jnp.float32).at[:, :emb].set(b1)
    b2_p = jnp.zeros((1, emb_pad), jnp.float32).at[:, :emb].set(b2)

    out_p = _run_kernel(adj, feat_p, base_p, w1_p, b1_p, w2_p, b2_p, signed_temp, tm)
    return out_p[:rows, :emb]


# -------------------------------------------------------------------------- references ---
def _reference_matched(left_features, right_features_k, edge_index, edge_weight,
                       right_features, c, b, params, right_to_left=False):
    """Pure-JAX reference using the SAME precision choices as the kernel (bf16 MXU inputs,
    f32 accumulation, fused base) -> tight tolerance."""
    w1, b1, w2, b2, temp = (params["w1"], params["b1"], params["w2"],
                            params["b2"], params["temp"])
    rows, cols, feat, base, vec, st = _decompose(
        left_features, right_features_k, right_features, c, b, temp, right_to_left)
    adj = build_dense_adj(edge_index, edge_weight, rows, cols)
    conv = jnp.dot(adj.astype(jnp.bfloat16), feat.astype(jnp.bfloat16),
                   preferred_element_type=jnp.float32)
    h = (base + st * vec) - st * conv
    h1 = jnp.maximum(jnp.dot(h.astype(jnp.bfloat16), w1.astype(jnp.bfloat16),
                             preferred_element_type=jnp.float32) + b1, 0.0)
    return jnp.dot(h1.astype(jnp.bfloat16), w2.astype(jnp.bfloat16),
                   preferred_element_type=jnp.float32) + b2


def _reference_f32(left_features, right_features_k, edge_index, edge_weight,
                   right_features, c, b, params, right_to_left=False):
    """Literal full-f32 translation of the PyTorch module forward."""
    n, m = c.shape[0], b.shape[0]
    w1, b1, w2, b2, temp = (params["w1"], params["b1"], params["w2"],
                            params["b2"], params["temp"])
    if right_to_left:
        adj = build_dense_adj(edge_index, edge_weight, m, n)
        feat = 2.0 * right_features - right_features_k
        h0 = left_features - temp[0] * (b - adj @ feat)
    else:
        adj = build_dense_adj(edge_index, edge_weight, n, m)
        h0 = right_features + temp[1] * (c - adj @ left_features)
    h = jnp.maximum(h0 @ w1 + b1, 0.0)
    return h @ w2 + b2


# ------------------------------------------------------------------------------- main ----
if __name__ == "__main__":
    key = jax.random.PRNGKey(0)
    emb = 32          # emb_size
    n = 300           # number of right nodes (= c.shape[0])
    m = 520           # number of left nodes  (= b.shape[0])
    E = 4096          # number of edges

    ks = jax.random.split(key, 16)
    left_features    = jax.random.normal(ks[0], (m, emb), jnp.float32)
    right_features   = jax.random.normal(ks[1], (n, emb), jnp.float32)
    right_features_k = jax.random.normal(ks[2], (n, emb), jnp.float32)
    c = jax.random.normal(ks[3], (n, 1), jnp.float32)
    b = jax.random.normal(ks[4], (m, 1), jnp.float32)

    # Edges for right_to_left=False: adjacency shape (n, m) -> rows in [0,n), cols in [0,m).
    edge_index_rfl = jnp.stack([jax.random.randint(ks[5], (E,), 0, n),
                                jax.random.randint(ks[6], (E,), 0, m)], axis=1)
    edge_weight_rfl = jax.random.uniform(ks[7], (E,), jnp.float32)

    # Edges for right_to_left=True: adjacency shape (m, n) -> rows in [0,m), cols in [0,n).
    edge_index_lfr = jnp.stack([jax.random.randint(ks[8], (E,), 0, m),
                                jax.random.randint(ks[9], (E,), 0, n)], axis=1)
    edge_weight_lfr = jax.random.uniform(ks[10], (E,), jnp.float32)

    # output_module: Linear -> ReLU -> Linear, temp filled with 0.9 (reset_parameters()).
    params = {
        "w1": jax.random.normal(ks[11], (emb, emb), jnp.float32) * 0.1,
        "b1": jax.random.normal(ks[12], (1, emb), jnp.float32) * 0.1,
        "w2": jax.random.normal(ks[13], (emb, emb), jnp.float32) * 0.1,
        "b2": jax.random.normal(ks[14], (1, emb), jnp.float32) * 0.1,
        "temp": jnp.full((2,), 0.9, jnp.float32),
    }
    # TODO(synk): self.conv1 (GCNConv) and self.activation_temp are never used in forward.

    cases = [(False, edge_index_rfl, edge_weight_rfl, n),
             (True, edge_index_lfr, edge_weight_lfr, m)]
    for right_to_left, ei, ew, exp_rows in cases:
        out = bipartite_graph_convolution(left_features, right_features_k, ei, ew,
                                          right_features, c, b, params,
                                          right_to_left=right_to_left)
        out = jax.block_until_ready(out)
        assert out.shape == (exp_rows, emb)

        # bf16-matched reference (same precision choices as the kernel): tight tolerance.
        ref_m = _reference_matched(left_features, right_features_k, ei, ew,
                                   right_features, c, b, params,
                                   right_to_left=right_to_left)
        assert jnp.allclose(out, ref_m, atol=2e-3, rtol=2e-3), right_to_left

        # full-f32 reference (module semantics): loose tolerance covering all bf16 casts.
        ref_f = _reference_f32(left_features, right_features_k, ei, ew,
                               right_features, c, b, params,
                               right_to_left=right_to_left)
        assert jnp.allclose(out, ref_f, atol=5e-2, rtol=5e-2), right_to_left

    print("KERNEL_OK")
</pallas_src>

<mosaic_0001>
module attributes {stable_mosaic.version = 11 : i64} {
  func.func @_bgc_kernel(%arg0: i32, %arg1: memref<160x640xbf16, #tpu.memory_space<vmem>>, %arg2: memref<640x128xbf16, #tpu.memory_space<vmem>>, %arg3: memref<160x128xf32, #tpu.memory_space<vmem>>, %arg4: memref<128x128xbf16, #tpu.memory_space<vmem>>, %arg5: memref<1x128xf32, #tpu.memory_space<vmem>>, %arg6: memref<128x128xbf16, #tpu.memory_space<vmem>>, %arg7: memref<1x128xf32, #tpu.memory_space<vmem>>, %arg8: memref<1xf32, #tpu.memory_space<smem>>, %arg9: memref<160x128xf32, #tpu.memory_space<vmem>>) attributes {dimension_semantics = [#tpu.dimension_semantics<parallel>], iteration_bounds = array<i64: 2>, scalar_prefetch = 0 : i64, scratch_operands = 0 : i64, tpu.core_type = #tpu.core_type<tc>, window_params = [{transform_indices = @transform_0, window_bounds = array<i64: 160, 640>}, {pipeline_mode = #tpu.pipeline_mode<synchronous>, transform_indices = @transform_1, window_bounds = array<i64: 640, 128>}, {transform_indices = @transform_2, window_bounds = array<i64: 160, 128>}, {pipeline_mode = #tpu.pipeline_mode<synchronous>, transform_indices = @transform_3, window_bounds = array<i64: 128, 128>}, {pipeline_mode = #tpu.pipeline_mode<synchronous>, transform_indices = @transform_4, window_bounds = array<i64: 1, 128>}, {pipeline_mode = #tpu.pipeline_mode<synchronous>, transform_indices = @transform_5, window_bounds = array<i64: 128, 128>}, {pipeline_mode = #tpu.pipeline_mode<synchronous>, transform_indices = @transform_6, window_bounds = array<i64: 1, 128>}, {transform_indices = @transform_7, window_bounds = array<i64: 1>}, {transform_indices = @transform_8, window_bounds = array<i64: 160, 128>}]} {
    %c0 = arith.constant 0 : index
    %c0_0 = arith.constant 0 : index
    %0 = vector.load %arg1[%c0, %c0_0] : memref<160x640xbf16, #tpu.memory_space<vmem>>, vector<160x640xbf16>
    %c0_1 = arith.constant 0 : index
    %c0_2 = arith.constant 0 : index
    %1 = vector.load %arg2[%c0_1, %c0_2] : memref<640x128xbf16, #tpu.memory_space<vmem>>, vector<640x128xbf16>
    %cst = arith.constant dense<0.000000e+00> : vector<160x128xf32>
    %2 = tpu.matmul %0, %1, %cst {dimension_numbers = #tpu.dot_dimension_numbers<[1], [0], [0], [1], [0, 0, 1, 1], [], []>} : vector<160x640xbf16>, vector<640x128xbf16>, vector<160x128xf32> -> vector<160x128xf32>
    %c0_3 = arith.constant 0 : index
    %3 = memref.load %arg8[%c0_3] : memref<1xf32, #tpu.memory_space<smem>>
    %c0_4 = arith.constant 0 : index
    %c0_5 = arith.constant 0 : index
    %4 = vector.load %arg3[%c0_4, %c0_5] : memref<160x128xf32, #tpu.memory_space<vmem>>, vector<160x128xf32>
    %5 = vector.broadcast %3 : f32 to vector<160x128xf32>
    %6 = arith.mulf %5, %2 : vector<160x128xf32>
    %7 = arith.subf %4, %6 : vector<160x128xf32>
    %8 = arith.truncf %7 : vector<160x128xf32> to vector<160x128xbf16>
    %c0_6 = arith.constant 0 : index
    %c0_7 = arith.constant 0 : index
    %9 = vector.load %arg4[%c0_6, %c0_7] : memref<128x128xbf16, #tpu.memory_space<vmem>>, vector<128x128xbf16>
    %cst_8 = arith.constant dense<0.000000e+00> : vector<160x128xf32>
    %10 = tpu.matmul %8, %9, %cst_8 {dimension_numbers = #tpu.dot_dimension_numbers<[1], [0], [0], [1], [0, 0, 1, 1], [], []>} : vector<160x128xbf16>, vector<128x128xbf16>, vector<160x128xf32> -> vector<160x128xf32>
    %c0_9 = arith.constant 0 : index
    %c0_10 = arith.constant 0 : index
    %11 = vector.load %arg5[%c0_9, %c0_10] : memref<1x128xf32, #tpu.memory_space<vmem>>, vector<1x128xf32>
    %12 = vector.broadcast %11 : vector<1x128xf32> to vector<160x128xf32>
    %13 = arith.addf %10, %12 : vector<160x128xf32>
    %cst_11 = arith.constant 0.000000e+00 : f32
    %14 = vector.broadcast %cst_11 : f32 to vector<160x128xf32>
    %15 = arith.maximumf %13, %14 : vector<160x128xf32>
    %16 = arith.truncf %15 : vector<160x128xf32> to vector<160x128xbf16>
    %c0_12 = arith.constant 0 : index
    %c0_13 = arith.constant 0 : index
    %17 = vector.load %arg6[%c0_12, %c0_13] : memref<128x128xbf16, #tpu.memory_space<vmem>>, vector<128x128xbf16>
    %cst_14 = arith.constant dense<0.000000e+00> : vector<160x128xf32>
    %18 = tpu.matmul %16, %17, %cst_14 {dimension_numbers = #tpu.dot_dimension_numbers<[1], [0], [0], [1], [0, 0, 1, 1], [], []>} : vector<160x128xbf16>, vector<128x128xbf16>, vector<160x128xf32> -> vector<160x128xf32>
    %c0_15 = arith.constant 0 : index
    %c0_16 = arith.constant 0 : index
    %19 = vector.load %arg7[%c0_15, %c0_16] : memref<1x128xf32, #tpu.memory_space<vmem>>, vector<1x128xf32>
    %20 = vector.broadcast %19 : vector<1x128xf32> to vector<160x128xf32>
    %21 = arith.addf %18, %20 : vector<160x128xf32>
    %c0_17 = arith.constant 0 : index
    %c0_18 = arith.constant 0 : index
    %22 = vector.load %arg9[%c0_17, %c0_18] : memref<160x128xf32, #tpu.memory_space<vmem>>, vector<160x128xf32>
    tpu.vector_store %arg9[%c0_17, %c0_18], %21 {strides = array<i32>} : memref<160x128xf32, #tpu.memory_space<vmem>>, vector<160x128xf32>,
    return
  }
  func.func @transform_0(%arg0: i32) -> (i32, i32) {
    %c0_i32 = arith.constant 0 : i32
    %c0_i32_0 = arith.constant 0 : i32
    return %arg0, %c0_i32 : i32, i32
  }
  func.func @transform_1(%arg0: i32) -> (i32, i32) {
    %c0_i32 = arith.constant 0 : i32
    %c0_i32_0 = arith.constant 0 : i32
    %c0_i32_1 = arith.constant 0 : i32
    return %c0_i32, %c0_i32_0 : i32, i32
  }
  func.func @transform_2(%arg0: i32) -> (i32, i32) {
    %c0_i32 = arith.constant 0 : i32
    %c0_i32_0 = arith.constant 0 : i32
    return %arg0, %c0_i32 : i32, i32
  }
  func.func @transform_3(%arg0: i32) -> (i32, i32) {
    %c0_i32 = arith.constant 0 : i32
    %c0_i32_0 = arith.constant 0 : i32
    %c0_i32_1 = arith.constant 0 : i32
    return %c0_i32, %c0_i32_0 : i32, i32
  }
  func.func @transform_4(%arg0: i32) -> (i32, i32) {
    %c0_i32 = arith.constant 0 : i32
    %c0_i32_0 = arith.constant 0 : i32
    %c0_i32_1 = arith.constant 0 : i32
    return %c0_i32, %c0_i32_0 : i32, i32
  }
  func.func @transform_5(%arg0: i32) -> (i32, i32) {
    %c0_i32 = arith.constant 0 : i32
    %c0_i32_0 = arith.constant 0 : i32
    %c0_i32_1 = arith.constant 0 : i32
    return %c0_i32, %c0_i32_0 : i32, i32
  }
  func.func @transform_6(%arg0: i32) -> (i32, i32) {
    %c0_i32 = arith.constant 0 : i32
    %c0_i32_0 = arith.constant 0 : i32
    %c0_i32_1 = arith.constant 0 : i32
    return %c0_i32, %c0_i32_0 : i32, i32
  }
  func.func @transform_7(%arg0: i32) -> i32 {
    %c0_i32 = arith.constant 0 : i32
    %c0_i32_0 = arith.constant 0 : i32
    return %c0_i32 : i32
  }
  func.func @transform_8(%arg0: i32) -> (i32, i32) {
    %c0_i32 = arith.constant 0 : i32
    %c0_i32_0 = arith.constant 0 : i32
    return %arg0, %c0_i32 : i32, i32
  }
}

</mosaic_0001>

<llo_original>
// kernel: tpu_custom_call.1
$region0: #{tpu_custom_call.1}
  #allocation0 [shape = 'u32[]', space=smem, size = 0x4, offset = 0x4, fixed_abs, tag = 'smem constant byte address 0x4 - core index']
  #allocation1 [shape = 'u32[144,128]{1,0:T(1,128)}', space=vmem, size = 0x12000, scoped, tag = 'internal scratch']
  #allocation2 [shape = 'f32[1]{0:T(128)S(6)}', space=smem, size = 0x200, scoped, tag = 'scoped memory for tpu_custom_call.1']
  %s0 = inlined_call_operand.hbm [shape: bf16[320,640], index: 0, kind: input, shape index: {}]
  %s1 = inlined_call_operand.hbm [shape: bf16[640,128], index: 1, kind: input, shape index: {}]
  %s2 = inlined_call_operand.hbm [shape: f32[320,128], index: 2, kind: input, shape index: {}]
  %s3 = inlined_call_operand.hbm [shape: bf16[128,128], index: 3, kind: input, shape index: {}]
  %s4 = inlined_call_operand.vmem [shape: f32[1,128], index: 4, kind: input, shape index: {}]
  %s5 = inlined_call_operand.hbm [shape: bf16[128,128], index: 5, kind: input, shape index: {}]
  %s6 = inlined_call_operand.vmem [shape: f32[1,128], index: 6, kind: input, shape index: {}]
  %s7 = inlined_call_operand.<no memory space> [shape: f32[1], index: 7, kind: input, shape index: {}]
  %s8 = inlined_call_operand.hbm [shape: f32[320,128], index: 8, kind: output, shape index: {}]
  %s9 = sld [smem:[#allocation0]]
  $region85: #{tpu_custom_call.1} parent=0
    _
  %s11 = ssub.s32 1, %s9
  %s12 = scalar_select 0, %s11, %s9
  %13 = sst [smem:[#allocation2]] %s7
  $region1: #{tpu_custom_call.1} parent=0
    #allocation3 [shape = 'u8[409600]{0}', space=vmem, size = 0x64000, scoped, tag = 'input window, operand 0']
    #allocation4 [shape = 's32[2]{0}', space=sflag, size = 0x8, scoped, tag = 'scoped memory for tpu_custom_call.1']
    #allocation5 [shape = 's32[2]{0}', space=sflag, size = 0x8, scoped, tag = 'scoped memory for tpu_custom_call.1']
    #allocation6 [shape = 'u8[163840]{0}', space=vmem, size = 0x28000, scoped, tag = 'input window, operand 1, single buffered']
    #allocation7 [shape = 's32[1]{0}', space=sflag, size = 0x4, scoped, tag = 'scoped memory for tpu_custom_call.1']
    #allocation8 [shape = 'u8[163840]{0}', space=vmem, size = 0x28000, scoped, tag = 'input window, operand 2']
    #allocation9 [shape = 'u8[32768]{0}', space=vmem, size = 0x8000, scoped, tag = 'input window, operand 3, single buffered']
    #allocation10 [shape = 'u8[32768]{0}', space=vmem, size = 0x8000, scoped, tag = 'input window, operand 5, single buffered']
    #allocation11 [shape = 's32[1]{0}', space=sflag, size = 0x4, scoped, tag = 'scoped memory for tpu_custom_call.1']
    #allocation12 [shape = 'u8[163840]{0}', space=vmem, size = 0x28000, scoped, tag = 'output window, operand 0']
    %14 = vsyncpa [#allocation4], 0
    %s15 = scalar_lea.sflag [#allocation4], 1
    %16 = vsyncpa %s15, 0
    %17 = vsyncpa [#allocation7], 0
    %18 = vsyncpa [#allocation11], 0
    %19 = vsyncpa [#allocation5], 0
    %s20 = scalar_lea.sflag [#allocation5], 1
    %21 = vsyncpa %s20, 0
    loop: start=0, step=1, limit=4
    $region2: #{tpu_custom_call.1} parent=1 // loop_pre_header
      _
    $region3: #{tpu_custom_call.1} parent=1 // loop_header
      %s23 = sphi 0, %s27
      %p24 = scmp.ge.s32.totalorder %s23, 4
      %s33 = sphi 0, %s35
      %s36 = sphi 0, %s33
      %s37 = sphi 0, %s36
      %s53 = sphi 0, %s37
      %s57 = sphi 0, %s57
      %s59 = sphi 0, %s57
      %s60 = sphi 0, %s59
      %s74 = sphi 0, %s60
      %s80 = sphi 0, %s82
      %s83 = sphi 0, %s80
      %s84 = sphi 0, %s83
      %s100 = sphi 0, %s84
      %s104 = sphi 0, %s104
      %s106 = sphi 0, %s104
      %s107 = sphi 0, %s106
      %s121 = sphi 0, %s107
      %s125 = sphi 0, %s125
      %s127 = sphi 0, %s125
      %s128 = sphi 0, %s127
      %s142 = sphi 0, %s128
      %s146 = sphi 0, %s146
      %s148 = sphi 0, %s146
      %s149 = sphi 0, %s148
      %s163 = sphi 0, %s149
      %s167 = sphi 0, %s167
      %s169 = sphi 0, %s167
      %s170 = sphi 0, %s169
      %s184 = sphi 0, %s170
      %s188 = sphi 0, %s188
      %s190 = sphi 0, %s188
      %s191 = sphi 0, %s190
      %s205 = sphi 0, %s191
      %s211 = sphi 0, %s213
      %s214 = sphi 0, %s211
      %s215 = sphi 0, %s214
      %s231 = sphi 0, %s215
    $region4: #{tpu_custom_call.1} parent=1 // loop_header_branch
      %26 = sbr.rel (%p24) target = $region8
    $region5: #{tpu_custom_call.1} parent=1 // loop_body
      %s28 = ssub.s32 %s23, 1
      %s29 = ssub.s32 %s23, 2
      %s30 = sadd.s32 %s23, 1
      %s31 = ssub.s32 %s23, %s30
      %p32 = scmp.eq.s32.totalorder %s31, 0
      %s34 = sadd.s32 %s33, 1
      %s35 = scalar_select %p32, %s33, %s34
      %p38 = pneg %p32
      %p39 = scmp.eq.s32.totalorder %s23, 1
      %p40 = por %p38, %p39
      %p41 = scmp.ne.s32.totalorder %s33, %s36
      %p42 = scmp.eq.s32.totalorder %s23, 0
      %p43 = por %p41, %p42
      %p44 = scmp.ne.s32.totalorder %s33, %s36
      %p45 = scmp.eq.s32.totalorder %s28, 1
      %p46 = por %p44, %p45
      %p47 = scmp.ne.s32.totalorder %s36, %s37
      %p48 = scmp.eq.s32.totalorder %s28, 0
      %p49 = por %p47, %p48
      %p50 = scmp.ne.s32.totalorder %s36, %s37
      %p51 = scmp.eq.s32.totalorder %s29, 1
      %p52 = por %p50, %p51
      %p54 = scmp.ne.s32.totalorder %s37, %s53
      %p55 = scmp.eq.s32.totalorder %s29, 0
      %p56 = por %p54, %p55
      %s58 = sadd.s32 %s57, 1
      %p61 = scmp.eq.s32.totalorder %s23, 1
      %p62 = scmp.ne.s32.totalorder %s57, %s59
      %p63 = scmp.eq.s32.totalorder %s23, 0
      %p64 = por %p62, %p63
      %p65 = scmp.ne.s32.totalorder %s57, %s59
      %p66 = scmp.eq.s32.totalorder %s28, 1
      %p67 = por %p65, %p66
      %p68 = scmp.ne.s32.totalorder %s59, %s60
      %p69 = scmp.eq.s32.totalorder %s28, 0
      %p70 = por %p68, %p69
      %p71 = scmp.ne.s32.totalorder %s59, %s60
      %p72 = scmp.eq.s32.totalorder %s29, 1
      %p73 = por %p71, %p72
      %p75 = scmp.ne.s32.totalorder %s60, %s74
      %p76 = scmp.eq.s32.totalorder %s29, 0
      %p77 = por %p75, %p76
      %s78 = ssub.s32 %s23, %s30
      %p79 = scmp.eq.s32.totalorder %s78, 0
      %s81 = sadd.s32 %s80, 1
      %s82 = scalar_select %p79, %s80, %s81
      %p85 = pneg %p79
      %p86 = scmp.eq.s32.totalorder %s23, 1
      %p87 = por %p85, %p86
      %p88 = scmp.ne.s32.totalorder %s80, %s83
      %p89 = scmp.eq.s32.totalorder %s23, 0
      %p90 = por %p88, %p89
      %p91 = scmp.ne.s32.totalorder %s80, %s83
      %p92 = scmp.eq.s32.totalorder %s28, 1
      %p93 = por %p91, %p92
      %p94 = scmp.ne.s32.totalorder %s83, %s84
      %p95 = scmp.eq.s32.totalorder %s28, 0
      %p96 = por %p94, %p95
      %p97 = scmp.ne.s32.totalorder %s83, %s84
      %p98 = scmp.eq.s32.totalorder %s29, 1
      %p99 = por %p97, %p98
      %p101 = scmp.ne.s32.totalorder %s84, %s100
      %p102 = scmp.eq.s32.totalorder %s29, 0
      %p103 = por %p101, %p102
      %s105 = sadd.s32 %s104, 1
      %p108 = scmp.eq.s32.totalorder %s23, 1
      %p109 = scmp.ne.s32.totalorder %s104, %s106
      %p110 = scmp.eq.s32.totalorder %s23, 0
      %p111 = por %p109, %p110
      %p112 = scmp.ne.s32.totalorder %s104, %s106
      %p113 = scmp.eq.s32.totalorder %s28, 1
      %p114 = por %p112, %p113
      %p115 = scmp.ne.s32.totalorder %s106, %s107
      %p116 = scmp.eq.s32.totalorder %s28, 0
      %p117 = por %p115, %p116
      %p118 = scmp.ne.s32.totalorder %s106, %s107
      %p119 = scmp.eq.s32.totalorder %s29, 1
      %p120 = por %p118, %p119
      %p122 = scmp.ne.s32.totalorder %s107, %s121
      %p123 = scmp.eq.s32.totalorder %s29, 0
      %p124 = por %p122, %p123
      %s126 = sadd.s32 %s125, 1
      %p129 = scmp.eq.s32.totalorder %s23, 1
      %p130 = scmp.ne.s32.totalorder %s125, %s127
      %p131 = scmp.eq.s32.totalorder %s23, 0
      %p132 = por %p130, %p131
      %p133 = scmp.ne.s32.totalorder %s125, %s127
      %p134 = scmp.eq.s32.totalorder %s28, 1
      %p135 = por %p133, %p134
      %p136 = scmp.ne.s32.totalorder %s127, %s128
      %p137 = scmp.eq.s32.totalorder %s28, 0
      %p138 = por %p136, %p137
      %p139 = scmp.ne.s32.totalorder %s127, %s128
      %p140 = scmp.eq.s32.totalorder %s29, 1
      %p141 = por %p139, %p140
      %p143 = scmp.ne.s32.totalorder %s128, %s142
      %p144 = scmp.eq.s32.totalorder %s29, 0
      %p145 = por %p143, %p144
      %s147 = sadd.s32 %s146, 1
      %p150 = scmp.eq.s32.totalorder %s23, 1
      %p151 = scmp.ne.s32.totalorder %s146, %s148
      %p152 = scmp.eq.s32.totalorder %s23, 0
      %p153 = por %p151, %p152
      %p154 = scmp.ne.s32.totalorder %s146, %s148
      %p155 = scmp.eq.s32.totalorder %s28, 1
      %p156 = por %p154, %p155
      %p157 = scmp.ne.s32.totalorder %s148, %s149
      %p158 = scmp.eq.s32.totalorder %s28, 0
      %p159 = por %p157, %p158
      %p160 = scmp.ne.s32.totalorder %s148, %s149
      %p161 = scmp.eq.s32.totalorder %s29, 1
      %p162 = por %p160, %p161
      %p164 = scmp.ne.s32.totalorder %s149, %s163
      %p165 = scmp.eq.s32.totalorder %s29, 0
      %p166 = por %p164, %p165
      %s168 = sadd.s32 %s167, 1
      %p171 = scmp.eq.s32.totalorder %s23, 1
      %p172 = scmp.ne.s32.totalorder %s167, %s169
      %p173 = scmp.eq.s32.totalorder %s23, 0
      %p174 = por %p172, %p173
      %p175 = scmp.ne.s32.totalorder %s167, %s169
      %p176 = scmp.eq.s32.totalorder %s28, 1
      %p177 = por %p175, %p176
      %p178 = scmp.ne.s32.totalorder %s169, %s170
      %p179 = scmp.eq.s32.totalorder %s28, 0
      %p180 = por %p178, %p179
      %p181 = scmp.ne.s32.totalorder %s169, %s170
      %p182 = scmp.eq.s32.totalorder %s29, 1
      %p183 = por %p181, %p182
      %p185 = scmp.ne.s32.totalorder %s170, %s184
      %p186 = scmp.eq.s32.totalorder %s29, 0
      %p187 = por %p185, %p186
      %s189 = sadd.s32 %s188, 1
      %p192 = scmp.eq.s32.totalorder %s23, 1
      %p193 = scmp.ne.s32.totalorder %s188, %s190
      %p194 = scmp.eq.s32.totalorder %s23, 0
      %p195 = por %p193, %p194
      %p196 = scmp.ne.s32.totalorder %s188, %s190
      %p197 = scmp.eq.s32.totalorder %s28, 1
      %p198 = por %p196, %p197
      %p199 = scmp.ne.s32.totalorder %s190, %s191
      %p200 = scmp.eq.s32.totalorder %s28, 0
      %p201 = por %p199, %p200
      %p202 = scmp.ne.s32.totalorder %s190, %s191
      %p203 = scmp.eq.s32.totalorder %s29, 1
      %p204 = por %p202, %p203
      %p206 = scmp.ne.s32.totalorder %s191, %s205
      %p207 = scmp.eq.s32.totalorder %s29, 0
      %p208 = por %p206, %p207
      %s209 = ssub.s32 %s23, %s30
      %p210 = scmp.eq.s32.totalorder %s209, 0
      %s212 = sadd.s32 %s211, 1
      %s213 = scalar_select %p210, %s211, %s212
      %p216 = pneg %p210
      %p217 = scmp.eq.s32.totalorder %s23, 1
      %p218 = por %p216, %p217
      %p219 = scmp.ne.s32.totalorder %s211, %s214
      %p220 = scmp.eq.s32.totalorder %s23, 0
      %p221 = por %p219, %p220
      %p222 = scmp.ne.s32.totalorder %s211, %s214
      %p223 = scmp.eq.s32.totalorder %s28, 1
      %p224 = por %p222, %p223
      %p225 = scmp.ne.s32.totalorder %s214, %s215
      %p226 = scmp.eq.s32.totalorder %s28, 0
      %p227 = por %p225, %p226
      %p228 = scmp.ne.s32.totalorder %s214, %s215
      %p229 = scmp.eq.s32.totalorder %s29, 1
      %p230 = por %p228, %p229
      %p232 = scmp.ne.s32.totalorder %s215, %s231
      %p233 = scmp.eq.s32.totalorder %s29, 0
      %p234 = por %p232, %p233
      %p235 = scmp.le.s32.totalorder 1, %s23
      %p236 = scmp.lt.s32.totalorder %s23, 3
      %p237 = pnand %p235, %p236
      %p238 = pneg %p237
      // Predicated region
      $region9: #{tpu_custom_call.1} parent=5 // pred_check
        _
      $region10: #{tpu_custom_call.1} parent=5 // pred_check_branch
        %240 = sbr.rel (%p237) target = $region12
      $region11: #{tpu_custom_call.1} parent=5 // pred_region
        %s241 = ssub.s32 %s23, 1
        // Predicated region
        $region13: #{tpu_custom_call.1} parent=11 // pred_check
          %p242 = pneg %p70
        $region14: #{tpu_custom_call.1} parent=11 // pred_check_branch
          %244 = sbr.rel (%p242) target = $region16
        $region15: #{tpu_custom_call.1} parent=11 // pred_region
          %s246 = ssub.s32 5120, 5120
          %247 = vsyncadd [#allocation7], %s246
          %s248 = sshll.u32 [#allocation6], 4
          %s249 = int_to_ptr.vmem [resolvable:$true] %s248
          %254 = dma.hbm_to_vmem [thread:$0]  %s1, 5120, %s249, [#allocation7], 64, 64, 4
        $region16: #{tpu_custom_call.1} parent=11 // pred_fallthru
          _
        // Predicated region
        $region17: #{tpu_custom_call.1} parent=11 // pred_check
          %p255 = pneg %p117
        $region18: #{tpu_custom_call.1} parent=11 // pred_check_branch
          %257 = sbr.rel (%p255) target = $region20
        $region19: #{tpu_custom_call.1} parent=11 // pred_region
          %s259 = ssub.s32 1024, 1024
          %260 = vsyncadd [#allocation7], %s259
          %s261 = sshll.u32 [#allocation9], 4
          %s262 = int_to_ptr.vmem [resolvable:$true] %s261
          %267 = dma.hbm_to_vmem [thread:$0]  %s3, 1024, %s262, [#allocation7], 64, 64, 4
        $region20: #{tpu_custom_call.1} parent=11 // pred_fallthru
          _
        // Predicated region
        $region21: #{tpu_custom_call.1} parent=11 // pred_check
          %p268 = pneg %p138
        $region22: #{tpu_custom_call.1} parent=11 // pred_check_branch
          %270 = sbr.rel (%p268) target = $region24
        $region23: #{tpu_custom_call.1} parent=11 // pred_region
          _
        $region24: #{tpu_custom_call.1} parent=11 // pred_fallthru
          _
        // Predicated region
        $region25: #{tpu_custom_call.1} parent=11 // pred_check
          %p271 = pneg %p159
        $region26: #{tpu_custom_call.1} parent=11 // pred_check_branch
          %273 = sbr.rel (%p271) target = $region28
        $region27: #{tpu_custom_call.1} parent=11 // pred_region
          %s275 = ssub.s32 1024, 1024
          %276 = vsyncadd [#allocation11], %s275
          %s277 = sshll.u32 [#allocation10], 4
          %s278 = int_to_ptr.vmem [resolvable:$true] %s277
          %283 = dma.hbm_to_vmem [thread:$0]  %s5, 1024, %s278, [#allocation11], 64, 64, 4
        $region28: #{tpu_custom_call.1} parent=11 // pred_fallthru
          _
        // Predicated region
        $region29: #{tpu_custom_call.1} parent=11 // pred_check
          %p284 = pneg %p180
        $region30: #{tpu_custom_call.1} parent=11 // pred_check_branch
          %286 = sbr.rel (%p284) target = $region32
        $region31: #{tpu_custom_call.1} parent=11 // pred_region
          _
        $region32: #{tpu_custom_call.1} parent=11 // pred_fallthru
          _
        // Predicated region
        $region33: #{tpu_custom_call.1} parent=11 // pred_check
          %p287 = pneg %p201
        $region34: #{tpu_custom_call.1} parent=11 // pred_check_branch
          %289 = sbr.rel (%p287) target = $region36
        $region35: #{tpu_custom_call.1} parent=11 // pred_region
          _
        $region36: #{tpu_custom_call.1} parent=11 // pred_fallthru
          _
      $region12: #{tpu_custom_call.1} parent=5 // pred_fallthru
        _
      %p290 = scmp.lt.s32.totalorder %s23, 2
      // Predicated region
      $region37: #{tpu_custom_call.1} parent=5 // pred_check
        %p291 = pneg %p290
      $region38: #{tpu_custom_call.1} parent=5 // pred_check_branch
        %293 = sbr.rel (%p291) target = $region40
      $region39: #{tpu_custom_call.1} parent=5 // pred_region
        // Predicated region
        $region41: #{tpu_custom_call.1} parent=39 // pred_check
          %p294 = pneg %p43
        $region42: #{tpu_custom_call.1} parent=39 // pred_check_branch
          %296 = sbr.rel (%p294) target = $region44
        $region43: #{tpu_custom_call.1} parent=39 // pred_region
          %s297 = sand.u32 %s23, 1
          %s298 = scalar_lea.sflag [#allocation4], %s297
          %s299 = sand.u32 %s33, 1
          %s300 = smul.addr %s299, 400
          %s301 = scalar_lea.vmem [#allocation3], %s300
          %s302 = smul.u32 20, %s23
          %s304 = ssub.s32 6400, 6400
          %305 = vsyncadd %s298, %s304
          %s306 = smul.addr %s302, 5
          %s307 = smul.addr %s306, 64
          %s308 = scalar_lea.hbm %s0, %s307
          %s309 = sshll.u32 %s301, 4
          %s310 = int_to_ptr.vmem [resolvable:$true] %s309
          %315 = dma.hbm_to_vmem [thread:$0]  %s308, 6400, %s310, %s298, 320, 320, 20
        $region44: #{tpu_custom_call.1} parent=39 // pred_fallthru
          _
        // Predicated region
        $region45: #{tpu_custom_call.1} parent=39 // pred_check
          %p316 = pneg %p90
        $region46: #{tpu_custom_call.1} parent=39 // pred_check_branch
          %318 = sbr.rel (%p316) target = $region48
        $region47: #{tpu_custom_call.1} parent=39 // pred_region
          %s319 = sand.u32 %s23, 1
          %s320 = scalar_lea.sflag [#allocation4], %s319
          %s321 = sand.u32 %s80, 1
          %s322 = smul.addr %s321, 160
          %s323 = scalar_lea.vmem [#allocation8], %s322
          %s324 = smul.u32 20, %s23
          %s326 = ssub.s32 2560, 2560
          %327 = vsyncadd %s320, %s326
          %s328 = smul.addr %s324, 128
          %s329 = scalar_lea.hbm %s2, %s328
          %s330 = sshll.u32 %s323, 4
          %s331 = int_to_ptr.vmem [resolvable:$true] %s330
          %336 = dma.hbm_to_vmem [thread:$0]  %s329, 2560, %s331, %s320, 128, 128, 8
        $region48: #{tpu_custom_call.1} parent=39 // pred_fallthru
          _
      $region40: #{tpu_custom_call.1} parent=5 // pred_fallthru
        _
      %p337 = scmp.le.s32.totalorder 1, %s23
      %p338 = scmp.lt.s32.totalorder %s23, 3
      %p339 = pnand %p337, %p338
      %p340 = pneg %p339
      // Predicated region
      $region49: #{tpu_custom_call.1} parent=5 // pred_check
        _
      $region50: #{tpu_custom_call.1} parent=5 // pred_check_branch
        %342 = sbr.rel (%p339) target = $region52
      $region51: #{tpu_custom_call.1} parent=5 // pred_region
        %s343 = ssub.s32 %s23, 1
        %s344 = sand.u32 %s28, 1
        %s345 = scalar_lea.sflag [#allocation4], %s344
        %s346 = sand.u32 %s36, 1
        %s347 = smul.addr %s346, 400
        %s348 = scalar_lea.vmem [#allocation3], %s347
        // Predicated region
        $region53: #{tpu_custom_call.1} parent=51 // pred_check
          %p349 = pneg %p49
        $region54: #{tpu_custom_call.1} parent=51 // pred_check_branch
          %351 = sbr.rel (%p349) target = $region56
        $region55: #{tpu_custom_call.1} parent=51 // pred_region
          %352 = dma.done %s345, 6400
        $region56: #{tpu_custom_call.1} parent=51 // pred_fallthru
          _
        // Predicated region
        $region57: #{tpu_custom_call.1} parent=51 // pred_check
          %p353 = pneg %p70
        $region58: #{tpu_custom_call.1} parent=51 // pred_check_branch
          %355 = sbr.rel (%p353) target = $region60
        $region59: #{tpu_custom_call.1} parent=51 // pred_region
          %356 = dma.done [#allocation7], 5120
        $region60: #{tpu_custom_call.1} parent=51 // pred_fallthru
          _
        %s357 = sand.u32 %s28, 1
        %s358 = scalar_lea.sflag [#allocation4], %s357
        %s359 = sand.u32 %s83, 1
        %s360 = smul.addr %s359, 160
        %s361 = scalar_lea.vmem [#allocation8], %s360
        // Predicated region
        $region61: #{tpu_custom_call.1} parent=51 // pred_check
          %p362 = pneg %p96
        $region62: #{tpu_custom_call.1} parent=51 // pred_check_branch
          %364 = sbr.rel (%p362) target = $region64
        $region63: #{tpu_custom_call.1} parent=51 // pred_region
          %365 = dma.done %s358, 2560
        $region64: #{tpu_custom_call.1} parent=51 // pred_fallthru
          _
        // Predicated region
        $region65: #{tpu_custom_call.1} parent=51 // pred_check
          %p366 = pneg %p117
        $region66: #{tpu_custom_call.1} parent=51 // pred_check_branch
          %368 = sbr.rel (%p366) target = $region68
        $region67: #{tpu_custom_call.1} parent=51 // pred_region
          %369 = dma.done [#allocation7], 1024
        $region68: #{tpu_custom_call.1} parent=51 // pred_fallthru
          _
        // Predicated region
        $region69: #{tpu_custom_call.1} parent=51 // pred_check
          %p370 = pneg %p159
        $region70: #{tpu_custom_call.1} parent=51 // pred_check_branch
          %372 = sbr.rel (%p370) target = $region72
        $region71: #{tpu_custom_call.1} parent=51 // pred_region
          %373 = dma.done [#allocation11], 1024
        $region72: #{tpu_custom_call.1} parent=51 // pred_fallthru
          _
        %s374 = sand.u32 %s28, 1
        %s375 = scalar_lea.sflag [#allocation4], %s374
        %s376 = sand.u32 %s36, 1
        %s377 = smul.addr %s376, 400
        %s378 = scalar_lea.vmem [#allocation3], %s377
        %p379 = pneg %p49
        %p380 = pneg %p46
        %p381 = pneg %p70
        %p382 = pneg %p67
        %s383 = sand.u32 %s28, 1
        %s384 = scalar_lea.sflag [#allocation4], %s383
        %s385 = sand.u32 %s83, 1
        %s386 = smul.addr %s385, 160
        %s387 = scalar_lea.vmem [#allocation8], %s386
        %p388 = pneg %p96
        %p389 = pneg %p93
        %p390 = pneg %p117
        %p391 = pneg %p114
        %p392 = pneg %p138
        %p393 = pneg %p135
        %p394 = pneg %p159
        %p395 = pneg %p156
        %p396 = pneg %p180
        %p397 = pneg %p177
        %p398 = pneg %p201
        %p399 = pneg %p198
        %p400 = pneg %p227
        %p401 = pneg %p224
        %s402 = sand.u32 %s214, 1
        %s403 = scalar_lea.sflag [#allocation5], %s402
        %s404 = sand.u32 %s214, 1
        %s405 = smul.addr %s404, 160
        %s406 = scalar_lea.vmem [#allocation12], %s405
        %s407 = smul.u32 20, %s28
        %s408 = smul.u32 20, %s28
        %s409 = smul.u32 20, %s28
        %v411 = vld [vmem:[%s348] sm:$0xff]
        %v412 = vld [vmem:[%s348 + $0x8] sm:$0xff]
        %v413 = vld [vmem:[%s348 + $0x10] sm:$0xf]
        %v414 = vld [vmem:[%s348 + $0x14] sm:$0xff]
        %v415 = vld [vmem:[%s348 + $0x1c] sm:$0xff]
        %v416 = vld [vmem:[%s348 + $0x24] sm:$0xf]
        %v417 = vld [vmem:[%s348 + $0x28] sm:$0xff]
        %v418 = vld [vmem:[%s348 + $0x30] sm:$0xff]
        %v419 = vld [vmem:[%s348 + $0x38] sm:$0xf]
        %v420 = vld [vmem:[%s348 + $0x3c] sm:$0xff]
        %v421 = vld [vmem:[%s348 + $0x44] sm:$0xff]
        %v422 = vld [vmem:[%s348 + $0x4c] sm:$0xf]
        %v423 = vld [vmem:[%s348 + $0x50] sm:$0xff]
        %v424 = vld [vmem:[%s348 + $0x58] sm:$0xff]
        %v425 = vld [vmem:[%s348 + $0x60] sm:$0xf]
        %v426 = vld [vmem:[%s348 + $0x64] sm:$0xff]
        %v427 = vld [vmem:[%s348 + $0x6c] sm:$0xff]
        %v428 = vld [vmem:[%s348 + $0x74] sm:$0xf]
        %v429 = vld [vmem:[%s348 + $0x78] sm:$0xff]
        %v430 = vld [vmem:[%s348 + $0x80] sm:$0xff]
        %v431 = vld [vmem:[%s348 + $0x88] sm:$0xf]
        %v432 = vld [vmem:[%s348 + $0x8c] sm:$0xff]
        %v433 = vld [vmem:[%s348 + $0x94] sm:$0xff]
        %v434 = vld [vmem:[%s348 + $0x9c] sm:$0xf]
        %v435 = vld [vmem:[%s348 + $0xa0] sm:$0xff]
        %v436 = vld [vmem:[%s348 + $0xa8] sm:$0xff]
        %v437 = vld [vmem:[%s348 + $0xb0] sm:$0xf]
        %v438 = vld [vmem:[%s348 + $0xb4] sm:$0xff]
        %v439 = vld [vmem:[%s348 + $0xbc] sm:$0xff]
        %v440 = vld [vmem:[%s348 + $0xc4] sm:$0xf]
        %v441 = vld [vmem:[%s348 + $0xc8] sm:$0xff]
        %v442 = vld [vmem:[%s348 + $0xd0] sm:$0xff]
        %v443 = vld [vmem:[%s348 + $0xd8] sm:$0xf]
        %v444 = vld [vmem:[%s348 + $0xdc] sm:$0xff]
        %v445 = vld [vmem:[%s348 + $0xe4] sm:$0xff]
        %v446 = vld [vmem:[%s348 + $0xec] sm:$0xf]
        %v447 = vld [vmem:[%s348 + $0xf0] sm:$0xff]
        %v448 = vld [vmem:[%s348 + $0xf8] sm:$0xff]
        %v449 = vld [vmem:[%s348 + $0x100] sm:$0xf]
        %v450 = vld [vmem:[%s348 + $0x104] sm:$0xff]
        %v451 = vld [vmem:[%s348 + $0x10c] sm:$0xff]
        %v452 = vld [vmem:[%s348 + $0x114] sm:$0xf]
        %v453 = vld [vmem:[%s348 + $0x118] sm:$0xff]
        %v454 = vld [vmem:[%s348 + $0x120] sm:$0xff]
        %v455 = vld [vmem:[%s348 + $0x128] sm:$0xf]
        %v456 = vld [vmem:[%s348 + $0x12c] sm:$0xff]
        %v457 = vld [vmem:[%s348 + $0x134] sm:$0xff]
        %v458 = vld [vmem:[%s348 + $0x13c] sm:$0xf]
        %v459 = vld [vmem:[%s348 + $0x140] sm:$0xff]
        %v460 = vld [vmem:[%s348 + $0x148] sm:$0xff]
        %v461 = vld [vmem:[%s348 + $0x150] sm:$0xf]
        %v462 = vld [vmem:[%s348 + $0x154] sm:$0xff]
        %v463 = vld [vmem:[%s348 + $0x15c] sm:$0xff]
        %v464 = vld [vmem:[%s348 + $0x164] sm:$0xf]
        %v465 = vld [vmem:[%s348 + $0x168] sm:$0xff]
        %v466 = vld [vmem:[%s348 + $0x170] sm:$0xff]
        %v467 = vld [vmem:[%s348 + $0x178] sm:$0xf]
        %v468 = vld [vmem:[%s348 + $0x17c] sm:$0xff]
        %v469 = vld [vmem:[%s348 + $0x184] sm:$0xff]
        %v470 = vld [vmem:[%s348 + $0x18c] sm:$0xf]
        %v471 = vld [vmem:[#allocation6] sm:$0xf]
        %v472 = vld [vmem:[#allocation6 + $0x4] sm:$0xf]
        %v473 = vld [vmem:[#allocation6 + $0x8] sm:$0xf]
        %v474 = vld [vmem:[#allocation6 + $0xc] sm:$0xf]
        %v475 = vld [vmem:[#allocation6 + $0x10] sm:$0xf]
        %v476 = vld [vmem:[#allocation6 + $0x14] sm:$0xf]
        %v477 = vld [vmem:[#allocation6 + $0x18] sm:$0xf]
        %v478 = vld [vmem:[#allocation6 + $0x1c] sm:$0xf]
        %v479 = vld [vmem:[#allocation6 + $0x20] sm:$0xf]
        %v480 = vld [vmem:[#allocation6 + $0x24] sm:$0xf]
        %v481 = vld [vmem:[#allocation6 + $0x28] sm:$0xf]
        %v482 = vld [vmem:[#allocation6 + $0x2c] sm:$0xf]
        %v483 = vld [vmem:[#allocation6 + $0x30] sm:$0xf]
        %v484 = vld [vmem:[#allocation6 + $0x34] sm:$0xf]
        %v485 = vld [vmem:[#allocation6 + $0x38] sm:$0xf]
        %v486 = vld [vmem:[#allocation6 + $0x3c] sm:$0xf]
        %v487 = vld [vmem:[#allocation6 + $0x40] sm:$0xf]
        %v488 = vld [vmem:[#allocation6 + $0x44] sm:$0xf]
        %v489 = vld [vmem:[#allocation6 + $0x48] sm:$0xf]
        %v490 = vld [vmem:[#allocation6 + $0x4c] sm:$0xf]
        %v491 = vld [vmem:[#allocation6 + $0x50] sm:$0xf]
        %v492 = vld [vmem:[#allocation6 + $0x54] sm:$0xf]
        %v493 = vld [vmem:[#allocation6 + $0x58] sm:$0xf]
        %v494 = vld [vmem:[#allocation6 + $0x5c] sm:$0xf]
        %v495 = vld [vmem:[#allocation6 + $0x60] sm:$0xf]
        %v496 = vld [vmem:[#allocation6 + $0x64] sm:$0xf]
        %v497 = vld [vmem:[#allocation6 + $0x68] sm:$0xf]
        %v498 = vld [vmem:[#allocation6 + $0x6c] sm:$0xf]
        %v499 = vld [vmem:[#allocation6 + $0x70] sm:$0xf]
        %v500 = vld [vmem:[#allocation6 + $0x74] sm:$0xf]
        %v501 = vld [vmem:[#allocation6 + $0x78] sm:$0xf]
        %v502 = vld [vmem:[#allocation6 + $0x7c] sm:$0xf]
        %v503 = vld [vmem:[#allocation6 + $0x80] sm:$0xf]
        %v504 = vld [vmem:[#allocation6 + $0x84] sm:$0xf]
        %v505 = vld [vmem:[#allocation6 + $0x88] sm:$0xf]
        %v506 = vld [vmem:[#allocation6 + $0x8c] sm:$0xf]
        %v507 = vld [vmem:[#allocation6 + $0x90] sm:$0xf]
        %v508 = vld [vmem:[#allocation6 + $0x94] sm:$0xf]
        %v509 = vld [vmem:[#allocation6 + $0x98] sm:$0xf]
        %v510 = vld [vmem:[#allocation6 + $0x9c] sm:$0xf]
        %v511 = vld [vmem:[#allocation6 + $0xa0] sm:$0xf]
        %v512 = vld [vmem:[#allocation6 + $0xa4] sm:$0xf]
        %v513 = vld [vmem:[#allocation6 + $0xa8] sm:$0xf]
        %v514 = vld [vmem:[#allocation6 + $0xac] sm:$0xf]
        %v515 = vld [vmem:[#allocation6 + $0xb0] sm:$0xf]
        %v516 = vld [vmem:[#allocation6 + $0xb4] sm:$0xf]
        %v517 = vld [vmem:[#allocation6 + $0xb8] sm:$0xf]
        %v518 = vld [vmem:[#allocation6 + $0xbc] sm:$0xf]
        %v519 = vld [vmem:[#allocation6 + $0xc0] sm:$0xf]
        %v520 = vld [vmem:[#allocation6 + $0xc4] sm:$0xf]
        %v521 = vld [vmem:[#allocation6 + $0xc8] sm:$0xf]
        %v522 = vld [vmem:[#allocation6 + $0xcc] sm:$0xf]
        %v523 = vld [vmem:[#allocation6 + $0xd0] sm:$0xf]
        %v524 = vld [vmem:[#allocation6 + $0xd4] sm:$0xf]
        %v525 = vld [vmem:[#allocation6 + $0xd8] sm:$0xf]
        %v526 = vld [vmem:[#allocation6 + $0xdc] sm:$0xf]
        %v527 = vld [vmem:[#allocation6 + $0xe0] sm:$0xf]
        %v528 = vld [vmem:[#allocation6 + $0xe4] sm:$0xf]
        %v529 = vld [vmem:[#allocation6 + $0xe8] sm:$0xf]
        %v530 = vld [vmem:[#allocation6 + $0xec] sm:$0xf]
        %v531 = vld [vmem:[#allocation6 + $0xf0] sm:$0xf]
        %v532 = vld [vmem:[#allocation6 + $0xf4] sm:$0xf]
        %v533 = vld [vmem:[#allocation6 + $0xf8] sm:$0xf]
        %v534 = vld [vmem:[#allocation6 + $0xfc] sm:$0xf]
        %v535 = vld [vmem:[#allocation6 + $0x100] sm:$0xf]
        %v536 = vld [vmem:[#allocation6 + $0x104] sm:$0xf]
        %v537 = vld [vmem:[#allocation6 + $0x108] sm:$0xf]
        %v538 = vld [vmem:[#allocation6 + $0x10c] sm:$0xf]
        %v539 = vld [vmem:[#allocation6 + $0x110] sm:$0xf]
        %v540 = vld [vmem:[#allocation6 + $0x114] sm:$0xf]
        %v541 = vld [vmem:[#allocation6 + $0x118] sm:$0xf]
        %v542 = vld [vmem:[#allocation6 + $0x11c] sm:$0xf]
        %v543 = vld [vmem:[#allocation6 + $0x120] sm:$0xf]
        %v544 = vld [vmem:[#allocation6 + $0x124] sm:$0xf]
        %v545 = vld [vmem:[#allocation6 + $0x128] sm:$0xf]
        %v546 = vld [vmem:[#allocation6 + $0x12c] sm:$0xf]
        %v547 = vld [vmem:[#allocation6 + $0x130] sm:$0xf]
        %v548 = vld [vmem:[#allocation6 + $0x134] sm:$0xf]
        %v549 = vld [vmem:[#allocation6 + $0x138] sm:$0xf]
        %v550 = vld [vmem:[#allocation6 + $0x13c] sm:$0xf]
        %v611 = vunpack.c.l.b16 %v411
        %v612 = vunpack.c.h.b16 %v411
        %v613 = vunpack.c.l.b16 %v412
        %v614 = vunpack.c.h.b16 %v412
        %v615 = vunpack.c.l.b16 %v413
        %v616 = vunpack.c.l.b16 %v414
        %v617 = vunpack.c.h.b16 %v414
        %v618 = vunpack.c.l.b16 %v415
        %v619 = vunpack.c.h.b16 %v415
        %v620 = vunpack.c.l.b16 %v416
        %v621 = vunpack.c.l.b16 %v417
        %v622 = vunpack.c.h.b16 %v417
        %v623 = vunpack.c.l.b16 %v418
        %v624 = vunpack.c.h.b16 %v418
        %v625 = vunpack.c.l.b16 %v419
        %v626 = vunpack.c.l.b16 %v420
        %v627 = vunpack.c.h.b16 %v420
        %v628 = vunpack.c.l.b16 %v421
        %v629 = vunpack.c.h.b16 %v421
        %v630 = vunpack.c.l.b16 %v422
        %v631 = vunpack.c.l.b16 %v423
        %v632 = vunpack.c.h.b16 %v423
        %v633 = vunpack.c.l.b16 %v424
        %v634 = vunpack.c.h.b16 %v424
        %v635 = vunpack.c.l.b16 %v425
        %v636 = vunpack.c.l.b16 %v426
        %v637 = vunpack.c.h.b16 %v426
        %v638 = vunpack.c.l.b16 %v427
        %v639 = vunpack.c.h.b16 %v427
        %v640 = vunpack.c.l.b16 %v428
        %v641 = vunpack.c.l.b16 %v429
        %v642 = vunpack.c.h.b16 %v429
        %v643 = vunpack.c.l.b16 %v430
        %v644 = vunpack.c.h.b16 %v430
        %v645 = vunpack.c.l.b16 %v431
        %v646 = vunpack.c.l.b16 %v432
        %v647 = vunpack.c.h.b16 %v432
        %v648 = vunpack.c.l.b16 %v433
        %v649 = vunpack.c.h.b16 %v433
        %v650 = vunpack.c.l.b16 %v434
        %v651 = vunpack.c.l.b16 %v435
        %v652 = vunpack.c.h.b16 %v435
        %v653 = vunpack.c.l.b16 %v436
        %v654 = vunpack.c.h.b16 %v436
        %v655 = vunpack.c.l.b16 %v437
        %v656 = vunpack.c.l.b16 %v438
        %v657 = vunpack.c.h.b16 %v438
        %v658 = vunpack.c.l.b16 %v439
        %v659 = vunpack.c.h.b16 %v439
        %v660 = vunpack.c.l.b16 %v440
        %v661 = vunpack.c.l.b16 %v441
        %v662 = vunpack.c.h.b16 %v441
        %v663 = vunpack.c.l.b16 %v442
        %v664 = vunpack.c.h.b16 %v442
        %v665 = vunpack.c.l.b16 %v443
        %v666 = vunpack.c.l.b16 %v444
        %v667 = vunpack.c.h.b16 %v444
        %v668 = vunpack.c.l.b16 %v445
        %v669 = vunpack.c.h.b16 %v445
        %v670 = vunpack.c.l.b16 %v446
        %v671 = vunpack.c.l.b16 %v447
        %v672 = vunpack.c.h.b16 %v447
        %v673 = vunpack.c.l.b16 %v448
        %v674 = vunpack.c.h.b16 %v448
        %v675 = vunpack.c.l.b16 %v449
        %v676 = vunpack.c.l.b16 %v450
        %v677 = vunpack.c.h.b16 %v450
        %v678 = vunpack.c.l.b16 %v451
        %v679 = vunpack.c.h.b16 %v451
        %v680 = vunpack.c.l.b16 %v452
        %v681 = vunpack.c.l.b16 %v453
        %v682 = vunpack.c.h.b16 %v453
        %v683 = vunpack.c.l.b16 %v454
        %v684 = vunpack.c.h.b16 %v454
        %v685 = vunpack.c.l.b16 %v455
        %v686 = vunpack.c.l.b16 %v456
        %v687 = vunpack.c.h.b16 %v456
        %v688 = vunpack.c.l.b16 %v457
        %v689 = vunpack.c.h.b16 %v457
        %v690 = vunpack.c.l.b16 %v458
        %v691 = vunpack.c.l.b16 %v459
        %v692 = vunpack.c.h.b16 %v459
        %v693 = vunpack.c.l.b16 %v460
        %v694 = vunpack.c.h.b16 %v460
        %v695 = vunpack.c.l.b16 %v461
        %v696 = vunpack.c.l.b16 %v462
        %v697 = vunpack.c.h.b16 %v462
        %v698 = vunpack.c.l.b16 %v463
        %v699 = vunpack.c.h.b16 %v463
        %v700 = vunpack.c.l.b16 %v464
        %v701 = vunpack.c.l.b16 %v465
        %v702 = vunpack.c.h.b16 %v465
        %v703 = vunpack.c.l.b16 %v466
        %v704 = vunpack.c.h.b16 %v466
        %v705 = vunpack.c.l.b16 %v467
        %v706 = vunpack.c.l.b16 %v468
        %v707 = vunpack.c.h.b16 %v468
        %v708 = vunpack.c.l.b16 %v469
        %v709 = vunpack.c.h.b16 %v469
        %v710 = vunpack.c.l.b16 %v470
        %v711 = vpack.c.b16 %v616, %v611
        %v712 = vpack.c.b16 %v617, %v612
        %v713 = vpack.c.b16 %v618, %v613
        %v714 = vpack.c.b16 %v619, %v614
        %v715 = vpack.c.b16 %v620, %v615
        %v716 = vpack.c.b16 %v626, %v621
        %v717 = vpack.c.b16 %v627, %v622
        %v718 = vpack.c.b16 %v628, %v623
        %v719 = vpack.c.b16 %v629, %v624
        %v720 = vpack.c.b16 %v630, %v625
        %v721 = vpack.c.b16 %v636, %v631
        %v722 = vpack.c.b16 %v637, %v632
        %v723 = vpack.c.b16 %v638, %v633
        %v724 = vpack.c.b16 %v639, %v634
        %v725 = vpack.c.b16 %v640, %v635
        %v726 = vpack.c.b16 %v646, %v641
        %v727 = vpack.c.b16 %v647, %v642
        %v728 = vpack.c.b16 %v648, %v643
        %v729 = vpack.c.b16 %v649, %v644
        %v730 = vpack.c.b16 %v650, %v645
        %v731 = vpack.c.b16 %v656, %v651
        %v732 = vpack.c.b16 %v657, %v652
        %v733 = vpack.c.b16 %v658, %v653
        %v734 = vpack.c.b16 %v659, %v654
        %v735 = vpack.c.b16 %v660, %v655
        %v736 = vpack.c.b16 %v666, %v661
        %v737 = vpack.c.b16 %v667, %v662
        %v738 = vpack.c.b16 %v668, %v663
        %v739 = vpack.c.b16 %v669, %v664
        %v740 = vpack.c.b16 %v670, %v665
        %v741 = vpack.c.b16 %v676, %v671
        %v742 = vpack.c.b16 %v677, %v672
        %v743 = vpack.c.b16 %v678, %v673
        %v744 = vpack.c.b16 %v679, %v674
        %v745 = vpack.c.b16 %v680, %v675
        %v746 = vpack.c.b16 %v686, %v681
        %v747 = vpack.c.b16 %v687, %v682
        %v748 = vpack.c.b16 %v688, %v683
        %v749 = vpack.c.b16 %v689, %v684
        %v750 = vpack.c.b16 %v690, %v685
        %v751 = vpack.c.b16 %v696, %v691
        %v752 = vpack.c.b16 %v697, %v692
        %v753 = vpack.c.b16 %v698, %v693
        %v754 = vpack.c.b16 %v699, %v694
        %v755 = vpack.c.b16 %v700, %v695
        %v756 = vpack.c.b16 %v706, %v701
        %v757 = vpack.c.b16 %v707, %v702
        %v758 = vpack.c.b16 %v708, %v703
        %v759 = vpack.c.b16 %v709, %v704
        %v760 = vpack.c.b16 %v710, %v705
        %v891 = vunpack.c.l.b16 %v471
        %v892 = vunpack.c.l.b16 %v472
        %v893 = vunpack.c.l.b16 %v473
        %v894 = vunpack.c.l.b16 %v474
        %v895 = vunpack.c.l.b16 %v475
        %v896 = vunpack.c.l.b16 %v476
        %v897 = vunpack.c.l.b16 %v477
        %v898 = vunpack.c.l.b16 %v478
        %v899 = vunpack.c.l.b16 %v479
        %v900 = vunpack.c.l.b16 %v480
        %v901 = vunpack.c.l.b16 %v481
        %v902 = vunpack.c.l.b16 %v482
        %v903 = vunpack.c.l.b16 %v483
        %v904 = vunpack.c.l.b16 %v484
        %v905 = vunpack.c.l.b16 %v485
        %v906 = vunpack.c.l.b16 %v486
        %v907 = vunpack.c.l.b16 %v487
        %v908 = vunpack.c.l.b16 %v488
        %v909 = vunpack.c.l.b16 %v489
        %v910 = vunpack.c.l.b16 %v490
        %v911 = vunpack.c.l.b16 %v491
        %v912 = vunpack.c.l.b16 %v492
        %v913 = vunpack.c.l.b16 %v493
        %v914 = vunpack.c.l.b16 %v494
        %v915 = vunpack.c.l.b16 %v495
        %v916 = vunpack.c.l.b16 %v496
        %v917 = vunpack.c.l.b16 %v497
        %v918 = vunpack.c.l.b16 %v498
        %v919 = vunpack.c.l.b16 %v499
        %v920 = vunpack.c.l.b16 %v500
        %v921 = vunpack.c.l.b16 %v501
        %v922 = vunpack.c.l.b16 %v502
        %v923 = vunpack.c.l.b16 %v503
        %v924 = vunpack.c.l.b16 %v504
        %v925 = vunpack.c.l.b16 %v505
        %v926 = vunpack.c.l.b16 %v506
        %v927 = vunpack.c.l.b16 %v507
        %v928 = vunpack.c.l.b16 %v508
        %v929 = vunpack.c.l.b16 %v509
        %v930 = vunpack.c.l.b16 %v510
        %v931 = vunpack.c.l.b16 %v511
        %v932 = vunpack.c.l.b16 %v512
        %v933 = vunpack.c.l.b16 %v513
        %v934 = vunpack.c.l.b16 %v514
        %v935 = vunpack.c.l.b16 %v515
        %v936 = vunpack.c.l.b16 %v516
        %v937 = vunpack.c.l.b16 %v517
        %v938 = vunpack.c.l.b16 %v518
        %v939 = vunpack.c.l.b16 %v519
        %v940 = vunpack.c.l.b16 %v520
        %v941 = vunpack.c.l.b16 %v521
        %v942 = vunpack.c.l.b16 %v522
        %v943 = vunpack.c.l.b16 %v523
        %v944 = vunpack.c.l.b16 %v524
        %v945 = vunpack.c.l.b16 %v525
        %v946 = vunpack.c.l.b16 %v526
        %v947 = vunpack.c.l.b16 %v527
        %v948 = vunpack.c.l.b16 %v528
        %v949 = vunpack.c.l.b16 %v529
        %v950 = vunpack.c.l.b16 %v530
        %v951 = vunpack.c.l.b16 %v531
        %v952 = vunpack.c.l.b16 %v532
        %v953 = vunpack.c.l.b16 %v533
        %v954 = vunpack.c.l.b16 %v534
        %v955 = vunpack.c.l.b16 %v535
        %v956 = vunpack.c.l.b16 %v536
        %v957 = vunpack.c.l.b16 %v537
        %v958 = vunpack.c.l.b16 %v538
        %v959 = vunpack.c.l.b16 %v539
        %v960 = vunpack.c.l.b16 %v540
        %v961 = vunpack.c.l.b16 %v541
        %v962 = vunpack.c.l.b16 %v542
        %v963 = vunpack.c.l.b16 %v543
        %v964 = vunpack.c.l.b16 %v544
        %v965 = vunpack.c.l.b16 %v545
        %v966 = vunpack.c.l.b16 %v546
        %v967 = vunpack.c.l.b16 %v547
        %v968 = vunpack.c.l.b16 %v548
        %v969 = vunpack.c.l.b16 %v549
        %v970 = vunpack.c.l.b16 %v550
        %v971 = vpack.c.b16 %v892, %v891
        %v972 = vpack.c.b16 %v894, %v893
        %v973 = vpack.c.b16 %v896, %v895
        %v974 = vpack.c.b16 %v898, %v897
        %v975 = vpack.c.b16 %v900, %v899
        %v976 = vpack.c.b16 %v902, %v901
        %v977 = vpack.c.b16 %v904, %v903
        %v978 = vpack.c.b16 %v906, %v905
        %v979 = vpack.c.b16 %v908, %v907
        %v980 = vpack.c.b16 %v910, %v909
        %v981 = vpack.c.b16 %v912, %v911
        %v982 = vpack.c.b16 %v914, %v913
        %v983 = vpack.c.b16 %v916, %v915
        %v984 = vpack.c.b16 %v918, %v917
        %v985 = vpack.c.b16 %v920, %v919
        %v986 = vpack.c.b16 %v922, %v921
        %v987 = vpack.c.b16 %v924, %v923
        %v988 = vpack.c.b16 %v926, %v925
        %v989 = vpack.c.b16 %v928, %v927
        %v990 = vpack.c.b16 %v930, %v929
        %v991 = vpack.c.b16 %v932, %v931
        %v992 = vpack.c.b16 %v934, %v933
        %v993 = vpack.c.b16 %v936, %v935
        %v994 = vpack.c.b16 %v938, %v937
        %v995 = vpack.c.b16 %v940, %v939
        %v996 = vpack.c.b16 %v942, %v941
        %v997 = vpack.c.b16 %v944, %v943
        %v998 = vpack.c.b16 %v946, %v945
        %v999 = vpack.c.b16 %v948, %v947
        %v1000 = vpack.c.b16 %v950, %v949
        %v1001 = vpack.c.b16 %v952, %v951
        %v1002 = vpack.c.b16 %v954, %v953
        %v1003 = vpack.c.b16 %v956, %v955
        %v1004 = vpack.c.b16 %v958, %v957
        %v1005 = vpack.c.b16 %v960, %v959
        %v1006 = vpack.c.b16 %v962, %v961
        %v1007 = vpack.c.b16 %v964, %v963
        %v1008 = vpack.c.b16 %v966, %v965
        %v1009 = vpack.c.b16 %v968, %v967
        %v1010 = vpack.c.b16 %v970, %v969
        %1051 = vmatprep.subr.bf16.mxu0 0
        %1052 = vmatpush1.bf16.msra.mxu0 %v971
        %1053 = vmatprep.subr.bf16.mxu0 0
        %1054 = vmatpush1.bf16.msra.mxu0 %v972
        %1055 = vmatprep.subr.bf16.mxu0 0
        %1056 = vmatpush1.bf16.msra.mxu0 %v973
        %1057 = vmatprep.subr.bf16.mxu0 0
        %1058 = vmatpush1.bf16.msra.mxu0 %v974
        %1059 = vmatprep.subr.bf16.mxu0 0
        %1060 = vmatpush1.bf16.msra.mxu0 %v975
        %1061 = vmatprep.subr.bf16.mxu0 0
        %1062 = vmatpush1.bf16.msra.mxu0 %v976
        %1063 = vmatprep.subr.bf16.mxu0 0
        %1064 = vmatpush1.bf16.msra.mxu0 %v977
        %1065 = vmatprep.subr.bf16.mxu0 0
        %1066 = vmatpush1.bf16.msra.mxu0 %v978
        %1067 = vmatprep.subr.bf16.mxu0 0
        %1068 = vmatpush1.bf16.msra.mxu0 %v979
        %1069 = vmatprep.subr.bf16.mxu0 0
        %1070 = vmatpush1.bf16.msra.mxu0 %v980
        %1071 = vmatprep.subr.bf16.mxu0 0
        %1072 = vmatpush1.bf16.msra.mxu0 %v981
        %1073 = vmatprep.subr.bf16.mxu0 0
        %1074 = vmatpush1.bf16.msra.mxu0 %v982
        %1075 = vmatprep.subr.bf16.mxu0 0
        %1076 = vmatpush1.bf16.msra.mxu0 %v983
        %1077 = vmatprep.subr.bf16.mxu0 0
        %1078 = vmatpush1.bf16.msra.mxu0 %v984
        %1079 = vmatprep.subr.bf16.mxu0 0
        %1080 = vmatpush1.bf16.msra.mxu0 %v985
        %1081 = vmatprep.subr.bf16.mxu0 0
        %1082 = vmatpush1.bf16.msra.mxu0 %v986
        %1083 = vmatprep.mubr.bf16.mxu0 %v712
        %1084 = vmatmul.mubr.bf16.gmra.mrb[0].mxu0 %v711
        %v1085 = vpop.f32.mrb[0].mxu0
        %v1086 = vadd.f32 0.0, %v1085
        %v1087 = vpop.f32.mrb[0].mxu0
        %v1088 = vpop.f32.mrb[0].mxu0
        %v1089 = vadd.f32 0.0, %v1088
        %v1090 = vpop.f32.mrb[0].mxu0
        %1091 = vmatprep.mubr.bf16.mxu0 %v717
        %1092 = vmatmul.mubr.bf16.gmra.mrb[0].mxu0 %v716
        %v1093 = vpop.f32.mrb[0].mxu0
        %v1094 = vadd.f32 0.0, %v1093
        %v1095 = vpop.f32.mrb[0].mxu0
        %v1096 = vpop.f32.mrb[0].mxu0
        %v1097 = vadd.f32 0.0, %v1096
        %v1098 = vpop.f32.mrb[0].mxu0
        %1099 = vmatprep.mubr.bf16.mxu0 %v722
        %1100 = vmatmul.mubr.bf16.gmra.mrb[0].mxu0 %v721
        %v1101 = vpop.f32.mrb[0].mxu0
        %v1102 = vadd.f32 0.0, %v1101
        %v1103 = vpop.f32.mrb[0].mxu0
        %v1104 = vpop.f32.mrb[0].mxu0
        %v1105 = vadd.f32 0.0, %v1104
        %v1106 = vpop.f32.mrb[0].mxu0
        %1107 = vmatprep.mubr.bf16.mxu0 %v727
        %1108 = vmatmul.mubr.bf16.gmra.mrb[0].mxu0 %v726
        %v1109 = vpop.f32.mrb[0].mxu0
        %v1110 = vadd.f32 0.0, %v1109
        %v1111 = vpop.f32.mrb[0].mxu0
        %v1112 = vpop.f32.mrb[0].mxu0
        %v1113 = vadd.f32 0.0, %v1112
        %v1114 = vpop.f32.mrb[0].mxu0
        %1115 = vmatprep.mubr.bf16.mxu0 %v732
        %1116 = vmatmul.mubr.bf16.gmra.mrb[0].mxu0 %v731
        %v1117 = vpop.f32.mrb[0].mxu0
        %v1118 = vadd.f32 0.0, %v1117
        %v1119 = vpop.f32.mrb[0].mxu0
        %v1120 = vpop.f32.mrb[0].mxu0
        %v1121 = vadd.f32 0.0, %v1120
        %v1122 = vpop.f32.mrb[0].mxu0
        %1123 = vmatprep.mubr.bf16.mxu0 %v737
        %1124 = vmatmul.mubr.bf16.gmra.mrb[0].mxu0 %v736
        %v1125 = vpop.f32.mrb[0].mxu0
        %v1126 = vadd.f32 0.0, %v1125
        %v1127 = vpop.f32.mrb[0].mxu0
        %v1128 = vpop.f32.mrb[0].mxu0
        %v1129 = vadd.f32 0.0, %v1128
        %v1130 = vpop.f32.mrb[0].mxu0
        %1131 = vmatprep.mubr.bf16.mxu0 %v742
        %1132 = vmatmul.mubr.bf16.gmra.mrb[0].mxu0 %v741
        %v1133 = vpop.f32.mrb[0].mxu0
        %v1134 = vadd.f32 0.0, %v1133
        %v1135 = vpop.f32.mrb[0].mxu0
        %v1136 = vpop.f32.mrb[0].mxu0
        %v1137 = vadd.f32 0.0, %v1136
        %v1138 = vpop.f32.mrb[0].mxu0
        %1139 = vmatprep.mubr.bf16.mxu0 %v747
        %1140 = vmatmul.mubr.bf16.gmra.mrb[0].mxu0 %v746
        %v1141 = vpop.f32.mrb[0].mxu0
        %v1142 = vadd.f32 0.0, %v1141
        %v1143 = vpop.f32.mrb[0].mxu0
        %v1144 = vpop.f32.mrb[0].mxu0
        %v1145 = vadd.f32 0.0, %v1144
        %v1146 = vpop.f32.mrb[0].mxu0
        %1147 = vmatprep.mubr.bf16.mxu0 %v752
        %1148 = vmatmul.mubr.bf16.gmra.mrb[0].mxu0 %v751
        %v1149 = vpop.f32.mrb[0].mxu0
        %v1150 = vadd.f32 0.0, %v1149
        %v1151 = vpop.f32.mrb[0].mxu0
        %v1152 = vpop.f32.mrb[0].mxu0
        %v1153 = vadd.f32 0.0, %v1152
        %v1154 = vpop.f32.mrb[0].mxu0
        %1155 = vmatprep.mubr.bf16.mxu0 %v757
        %1156 = vmatmul.mubr.bf16.gmra.mrb[0].mxu0 %v756
        %v1157 = vpop.f32.mrb[0].mxu0
        %v1158 = vadd.f32 0.0, %v1157
        %v1159 = vpop.f32.mrb[0].mxu0
        %v1160 = vpop.f32.mrb[0].mxu0
        %v1161 = vadd.f32 0.0, %v1160
        %v1162 = vpop.f32.mrb[0].mxu0
        %1163 = vdwg.mxu0
        %1164 = vmatprep.subr.bf16.mxu0 0
        %1165 = vmatpush1.bf16.msra.mxu0 %v987
        %1166 = vmatprep.subr.bf16.mxu0 0
        %1167 = vmatpush1.bf16.msra.mxu0 %v988
        %1168 = vmatprep.subr.bf16.mxu0 0
        %1169 = vmatpush1.bf16.msra.mxu0 %v989
        %1170 = vmatprep.subr.bf16.mxu0 0
        %1171 = vmatpush1.bf16.msra.mxu0 %v990
        %1172 = vmatprep.subr.bf16.mxu0 0
        %1173 = vmatpush1.bf16.msra.mxu0 %v991
        %1174 = vmatprep.subr.bf16.mxu0 0
        %1175 = vmatpush1.bf16.msra.mxu0 %v992
        %1176 = vmatprep.subr.bf16.mxu0 0
        %1177 = vmatpush1.bf16.msra.mxu0 %v993
        %1178 = vmatprep.subr.bf16.mxu0 0
        %1179 = vmatpush1.bf16.msra.mxu0 %v994
        %1180 = vmatprep.subr.bf16.mxu0 0
        %1181 = vmatpush1.bf16.msra.mxu0 %v995
        %1182 = vmatprep.subr.bf16.mxu0 0
        %1183 = vmatpush1.bf16.msra.mxu0 %v996
        %1184 = vmatprep.subr.bf16.mxu0 0
        %1185 = vmatpush1.bf16.msra.mxu0 %v997
        %1186 = vmatprep.subr.bf16.mxu0 0
        %1187 = vmatpush1.bf16.msra.mxu0 %v998
        %1188 = vmatprep.subr.bf16.mxu0 0
        %1189 = vmatpush1.bf16.msra.mxu0 %v999
        %1190 = vmatprep.subr.bf16.mxu0 0
        %1191 = vmatpush1.bf16.msra.mxu0 %v1000
        %1192 = vmatprep.subr.bf16.mxu0 0
        %1193 = vmatpush1.bf16.msra.mxu0 %v1001
        %1194 = vmatprep.subr.bf16.mxu0 0
        %1195 = vmatpush1.bf16.msra.mxu0 %v1002
        %1196 = vmatprep.mubr.bf16.mxu0 %v714
        %1197 = vmatmul.mubr.bf16.gmra.mrb[0].mxu0 %v713
        %v1198 = vpop.f32.mrb[0].mxu0
        %v1199 = vadd.f32 %v1086, %v1198
        %v1200 = vpop.f32.mrb[0].mxu0
        %v1201 = vpop.f32.mrb[0].mxu0
        %v1202 = vadd.f32 %v1089, %v1201
        %v1203 = vpop.f32.mrb[0].mxu0
        %1204 = vmatprep.mubr.bf16.mxu0 %v719
        %1205 = vmatmul.mubr.bf16.gmra.mrb[0].mxu0 %v718
        %v1206 = vpop.f32.mrb[0].mxu0
        %v1207 = vadd.f32 %v1094, %v1206
        %v1208 = vpop.f32.mrb[0].mxu0
        %v1209 = vpop.f32.mrb[0].mxu0
        %v1210 = vadd.f32 %v1097, %v1209
        %v1211 = vpop.f32.mrb[0].mxu0
        %1212 = vmatprep.mubr.bf16.mxu0 %v724
        %1213 = vmatmul.mubr.bf16.gmra.mrb[0].mxu0 %v723
        %v1214 = vpop.f32.mrb[0].mxu0
        %v1215 = vadd.f32 %v1102, %v1214
        %v1216 = vpop.f32.mrb[0].mxu0
        %v1217 = vpop.f32.mrb[0].mxu0
        %v1218 = vadd.f32 %v1105, %v1217
        %v1219 = vpop.f32.mrb[0].mxu0
        %1220 = vmatprep.mubr.bf16.mxu0 %v729
        %1221 = vmatmul.mubr.bf16.gmra.mrb[0].mxu0 %v728
        %v1222 = vpop.f32.mrb[0].mxu0
        %v1223 = vadd.f32 %v1110, %v1222
        %v1224 = vpop.f32.mrb[0].mxu0
        %v1225 = vpop.f32.mrb[0].mxu0
        %v1226 = vadd.f32 %v1113, %v1225
        %v1227 = vpop.f32.mrb[0].mxu0
        %1228 = vmatprep.mubr.bf16.mxu0 %v734
        %1229 = vmatmul.mubr.bf16.gmra.mrb[0].mxu0 %v733
        %v1230 = vpop.f32.mrb[0].mxu0
        %v1231 = vadd.f32 %v1118, %v1230
        %v1232 = vpop.f32.mrb[0].mxu0
        %v1233 = vpop.f32.mrb[0].mxu0
        %v1234 = vadd.f32 %v1121, %v1233
        %v1235 = vpop.f32.mrb[0].mxu0
        %1236 = vmatprep.mubr.bf16.mxu0 %v739
        %1237 = vmatmul.mubr.bf16.gmra.mrb[0].mxu0 %v738
        %v1238 = vpop.f32.mrb[0].mxu0
        %v1239 = vadd.f32 %v1126, %v1238
        %v1240 = vpop.f32.mrb[0].mxu0
        %v1241 = vpop.f32.mrb[0].mxu0
        %v1242 = vadd.f32 %v1129, %v1241
        %v1243 = vpop.f32.mrb[0].mxu0
        %1244 = vmatprep.mubr.bf16.mxu0 %v744
        %1245 = vmatmul.mubr.bf16.gmra.mrb[0].mxu0 %v743
        %v1246 = vpop.f32.mrb[0].mxu0
        %v1247 = vadd.f32 %v1134, %v1246
        %v1248 = vpop.f32.mrb[0].mxu0
        %v1249 = vpop.f32.mrb[0].mxu0
        %v1250 = vadd.f32 %v1137, %v1249
        %v1251 = vpop.f32.mrb[0].mxu0
        %1252 = vmatprep.mubr.bf16.mxu0 %v749
        %1253 = vmatmul.mubr.bf16.gmra.mrb[0].mxu0 %v748
        %v1254 = vpop.f32.mrb[0].mxu0
        %v1255 = vadd.f32 %v1142, %v1254
        %v1256 = vpop.f32.mrb[0].mxu0
        %v1257 = vpop.f32.mrb[0].mxu0
        %v1258 = vadd.f32 %v1145, %v1257
        %v1259 = vpop.f32.mrb[0].mxu0
        %1260 = vmatprep.mubr.bf16.mxu0 %v754
        %1261 = vmatmul.mubr.bf16.gmra.mrb[0].mxu0 %v753
        %v1262 = vpop.f32.mrb[0].mxu0
        %v1263 = vadd.f32 %v1150, %v1262
        %v1264 = vpop.f32.mrb[0].mxu0
        %v1265 = vpop.f32.mrb[0].mxu0
        %v1266 = vadd.f32 %v1153, %v1265
        %v1267 = vpop.f32.mrb[0].mxu0
        %1268 = vmatprep.mubr.bf16.mxu0 %v759
        %1269 = vmatmul.mubr.bf16.gmra.mrb[0].mxu0 %v758
        %v1270 = vpop.f32.mrb[0].mxu0
        %v1271 = vadd.f32 %v1158, %v1270
        %v1272 = vpop.f32.mrb[0].mxu0
        %v1273 = vpop.f32.mrb[0].mxu0
        %v1274 = vadd.f32 %v1161, %v1273
        %v1275 = vpop.f32.mrb[0].mxu0
        %1276 = vdwg.mxu0
        %1277 = vmatprep.subr.bf16.mxu0 0
        %1278 = vmatpush1.bf16.msra.mxu0 %v1003
        %1279 = vmatprep.subr.bf16.mxu0 0
        %1280 = vmatpush1.bf16.msra.mxu0 %v1004
        %1281 = vmatprep.subr.bf16.mxu0 0
        %1282 = vmatpush1.bf16.msra.mxu0 %v1005
        %1283 = vmatprep.subr.bf16.mxu0 0
        %1284 = vmatpush1.bf16.msra.mxu0 %v1006
        %1285 = vmatprep.subr.bf16.mxu0 0
        %1286 = vmatpush1.bf16.msra.mxu0 %v1007
        %1287 = vmatprep.subr.bf16.mxu0 0
        %1288 = vmatpush1.bf16.msra.mxu0 %v1008
        %1289 = vmatprep.subr.bf16.mxu0 0
        %1290 = vmatpush1.bf16.msra.mxu0 %v1009
        %1291 = vmatprep.subr.bf16.mxu0 0
        %1292 = vmatpush1.bf16.msra.mxu0 %v1010
        %1293 = vmatprep.subr.bf16.mxu0 0
        %1294 = vmatpush1.bf16.msra.mxu0 0
        %1295 = vmatprep.subr.bf16.mxu0 0
        %1296 = vmatpush1.bf16.msra.mxu0 0
        %1297 = vmatprep.subr.bf16.mxu0 0
        %1298 = vmatpush1.bf16.msra.mxu0 0
        %1299 = vmatprep.subr.bf16.mxu0 0
        %1300 = vmatpush1.bf16.msra.mxu0 0
        %1301 = vmatprep.subr.bf16.mxu0 0
        %1302 = vmatpush1.bf16.msra.mxu0 0
        %1303 = vmatprep.subr.bf16.mxu0 0
        %1304 = vmatpush1.bf16.msra.mxu0 0
        %1305 = vmatprep.subr.bf16.mxu0 0
        %1306 = vmatpush1.bf16.msra.mxu0 0
        %1307 = vmatprep.subr.bf16.mxu0 0
        %1308 = vmatpush1.bf16.msra.mxu0 0
        %1309 = vmatprep.mubr.bf16.mxu0 0
        %1310 = vmatmul.mubr.bf16.gmra.mrb[0].mxu0 %v715
        %v1311 = vpop.f32.mrb[0].mxu0
        %v1312 = vadd.f32 %v1199, %v1311
        %v1313 = vpop.f32.mrb[0].mxu0
        %v1314 = vpop.f32.mrb[0].mxu0
        %v1315 = vadd.f32 %v1202, %v1314
        %v1316 = vpop.f32.mrb[0].mxu0
        %1317 = vmatprep.mubr.bf16.mxu0 0
        %1318 = vmatmul.mubr.bf16.gmra.mrb[0].mxu0 %v720
        %v1319 = vpop.f32.mrb[0].mxu0
        %v1320 = vadd.f32 %v1207, %v1319
        %v1321 = vpop.f32.mrb[0].mxu0
        %v1322 = vpop.f32.mrb[0].mxu0
        %v1323 = vadd.f32 %v1210, %v1322
        %v1324 = vpop.f32.mrb[0].mxu0
        %1325 = vmatprep.mubr.bf16.mxu0 0
        %1326 = vmatmul.mubr.bf16.gmra.mrb[0].mxu0 %v725
        %v1327 = vpop.f32.mrb[0].mxu0
        %v1328 = vadd.f32 %v1215, %v1327
        %v1329 = vpop.f32.mrb[0].mxu0
        %v1330 = vpop.f32.mrb[0].mxu0
        %v1331 = vadd.f32 %v1218, %v1330
        %v1332 = vpop.f32.mrb[0].mxu0
        %1333 = vmatprep.mubr.bf16.mxu0 0
        %1334 = vmatmul.mubr.bf16.gmra.mrb[0].mxu0 %v730
        %v1335 = vpop.f32.mrb[0].mxu0
        %v1336 = vadd.f32 %v1223, %v1335
        %v1337 = vpop.f32.mrb[0].mxu0
        %v1338 = vpop.f32.mrb[0].mxu0
        %v1339 = vadd.f32 %v1226, %v1338
        %v1340 = vpop.f32.mrb[0].mxu0
        %1341 = vmatprep.mubr.bf16.mxu0 0
        %1342 = vmatmul.mubr.bf16.gmra.mrb[0].mxu0 %v735
        %v1343 = vpop.f32.mrb[0].mxu0
        %v1344 = vadd.f32 %v1231, %v1343
        %v1345 = vpop.f32.mrb[0].mxu0
        %v1346 = vpop.f32.mrb[0].mxu0
        %v1347 = vadd.f32 %v1234, %v1346
        %v1348 = vpop.f32.mrb[0].mxu0
        %1349 = vmatprep.mubr.bf16.mxu0 0
        %1350 = vmatmul.mubr.bf16.gmra.mrb[0].mxu0 %v740
        %v1351 = vpop.f32.mrb[0].mxu0
        %v1352 = vadd.f32 %v1239, %v1351
        %v1353 = vpop.f32.mrb[0].mxu0
        %v1354 = vpop.f32.mrb[0].mxu0
        %v1355 = vadd.f32 %v1242, %v1354
        %v1356 = vpop.f32.mrb[0].mxu0
        %1357 = vmatprep.mubr.bf16.mxu0 0
        %1358 = vmatmul.mubr.bf16.gmra.mrb[0].mxu0 %v745
        %v1359 = vpop.f32.mrb[0].mxu0
        %v1360 = vadd.f32 %v1247, %v1359
        %v1361 = vpop.f32.mrb[0].mxu0
        %v1362 = vpop.f32.mrb[0].mxu0
        %v1363 = vadd.f32 %v1250, %v1362
        %v1364 = vpop.f32.mrb[0].mxu0
        %1365 = vmatprep.mubr.bf16.mxu0 0
        %1366 = vmatmul.mubr.bf16.gmra.mrb[0].mxu0 %v750
        %v1367 = vpop.f32.mrb[0].mxu0
        %v1368 = vadd.f32 %v1255, %v1367
        %v1369 = vpop.f32.mrb[0].mxu0
        %v1370 = vpop.f32.mrb[0].mxu0
        %v1371 = vadd.f32 %v1258, %v1370
        %v1372 = vpop.f32.mrb[0].mxu0
        %1373 = vmatprep.mubr.bf16.mxu0 0
        %1374 = vmatmul.mubr.bf16.gmra.mrb[0].mxu0 %v755
        %v1375 = vpop.f32.mrb[0].mxu0
        %v1376 = vadd.f32 %v1263, %v1375
        %v1377 = vpop.f32.mrb[0].mxu0
        %v1378 = vpop.f32.mrb[0].mxu0
        %v1379 = vadd.f32 %v1266, %v1378
        %v1380 = vpop.f32.mrb[0].mxu0
        %1381 = vmatprep.mubr.bf16.mxu0 0
        %1382 = vmatmul.mubr.bf16.gmra.mrb[0].mxu0 %v760
        %v1383 = vpop.f32.mrb[0].mxu0
        %v1384 = vadd.f32 %v1271, %v1383
        %v1385 = vpop.f32.mrb[0].mxu0
        %v1386 = vpop.f32.mrb[0].mxu0
        %v1387 = vadd.f32 %v1274, %v1386
        %v1388 = vpop.f32.mrb[0].mxu0
        %1389 = vdwg.mxu0
        %s1390 = sld [smem:[#allocation2]]
        %v1391 = vld [vmem:[%s361] sm:$0xff]
        %v1392 = vld [vmem:[%s361 + $0x8] sm:$0xff]
        %v1393 = vld [vmem:[%s361 + $0x10] sm:$0xff]
        %v1394 = vld [vmem:[%s361 + $0x18] sm:$0xff]
        %v1395 = vld [vmem:[%s361 + $0x20] sm:$0xff]
        %v1396 = vld [vmem:[%s361 + $0x28] sm:$0xff]
        %v1397 = vld [vmem:[%s361 + $0x30] sm:$0xff]
        %v1398 = vld [vmem:[%s361 + $0x38] sm:$0xff]
        %v1399 = vld [vmem:[%s361 + $0x40] sm:$0xff]
        %v1400 = vld [vmem:[%s361 + $0x48] sm:$0xff]
        %v1401 = vld [vmem:[%s361 + $0x50] sm:$0xff]
        %v1402 = vld [vmem:[%s361 + $0x58] sm:$0xff]
        %v1403 = vld [vmem:[%s361 + $0x60] sm:$0xff]
        %v1404 = vld [vmem:[%s361 + $0x68] sm:$0xff]
        %v1405 = vld [vmem:[%s361 + $0x70] sm:$0xff]
        %v1406 = vld [vmem:[%s361 + $0x78] sm:$0xff]
        %v1407 = vld [vmem:[%s361 + $0x80] sm:$0xff]
        %v1408 = vld [vmem:[%s361 + $0x88] sm:$0xff]
        %v1409 = vld [vmem:[%s361 + $0x90] sm:$0xff]
        %v1410 = vld [vmem:[%s361 + $0x98] sm:$0xff]
        %v1411 = vstv %s1390
        %v1412 = vmul.f32 %v1411, %v1312
        %v1413 = vmul.f32 %v1411, %v1315
        %v1414 = vmul.f32 %v1411, %v1320
        %v1415 = vmul.f32 %v1411, %v1323
        %v1416 = vmul.f32 %v1411, %v1328
        %v1417 = vmul.f32 %v1411, %v1331
        %v1418 = vmul.f32 %v1411, %v1336
        %v1419 = vmul.f32 %v1411, %v1339
        %v1420 = vmul.f32 %v1411, %v1344
        %v1421 = vmul.f32 %v1411, %v1347
        %v1422 = vmul.f32 %v1411, %v1352
        %v1423 = vmul.f32 %v1411, %v1355
        %v1424 = vmul.f32 %v1411, %v1360
        %v1425 = vmul.f32 %v1411, %v1363
        %v1426 = vmul.f32 %v1411, %v1368
        %v1427 = vmul.f32 %v1411, %v1371
        %v1428 = vmul.f32 %v1411, %v1376
        %v1429 = vmul.f32 %v1411, %v1379
        %v1430 = vmul.f32 %v1411, %v1384
        %v1431 = vmul.f32 %v1411, %v1387
        %v1432 = vsub.f32 %v1391, %v1412
        %v1433 = vsub.f32 %v1392, %v1413
        %v1434 = vsub.f32 %v1393, %v1414
        %v1435 = vsub.f32 %v1394, %v1415
        %v1436 = vsub.f32 %v1395, %v1416
        %v1437 = vsub.f32 %v1396, %v1417
        %v1438 = vsub.f32 %v1397, %v1418
        %v1439 = vsub.f32 %v1398, %v1419
        %v1440 = vsub.f32 %v1399, %v1420
        %v1441 = vsub.f32 %v1400, %v1421
        %v1442 = vsub.f32 %v1401, %v1422
        %v1443 = vsub.f32 %v1402, %v1423
        %v1444 = vsub.f32 %v1403, %v1424
        %v1445 = vsub.f32 %v1404, %v1425
        %v1446 = vsub.f32 %v1405, %v1426
        %v1447 = vsub.f32 %v1406, %v1427
        %v1448 = vsub.f32 %v1407, %v1428
        %v1449 = vsub.f32 %v1408, %v1429
        %v1450 = vsub.f32 %v1409, %v1430
        %v1451 = vsub.f32 %v1410, %v1431
        %v1452 = vpack.c.bf16 %v1433, %v1432
        %v1453 = vpack.c.bf16 %v1435, %v1434
        %v1454 = vpack.c.bf16 %v1437, %v1436
        %v1455 = vpack.c.bf16 %v1439, %v1438
        %v1456 = vpack.c.bf16 %v1441, %v1440
        %v1457 = vpack.c.bf16 %v1443, %v1442
        %v1458 = vpack.c.bf16 %v1445, %v1444
        %v1459 = vpack.c.bf16 %v1447, %v1446
        %v1460 = vpack.c.bf16 %v1449, %v1448
        %v1461 = vpack.c.bf16 %v1451, %v1450
        %v1462 = vld [vmem:[#allocation9] sm:$0xf]
        %v1463 = vld [vmem:[#allocation9 + $0x4] sm:$0xf]
        %v1464 = vld [vmem:[#allocation9 + $0x8] sm:$0xf]
        %v1465 = vld [vmem:[#allocation9 + $0xc] sm:$0xf]
        %v1466 = vld [vmem:[#allocation9 + $0x10] sm:$0xf]
        %v1467 = vld [vmem:[#allocation9 + $0x14] sm:$0xf]
        %v1468 = vld [vmem:[#allocation9 + $0x18] sm:$0xf]
        %v1469 = vld [vmem:[#allocation9 + $0x1c] sm:$0xf]
        %v1470 = vld [vmem:[#allocation9 + $0x20] sm:$0xf]
        %v1471 = vld [vmem:[#allocation9 + $0x24] sm:$0xf]
        %v1472 = vld [vmem:[#allocation9 + $0x28] sm:$0xf]
        %v1473 = vld [vmem:[#allocation9 + $0x2c] sm:$0xf]
        %v1474 = vld [vmem:[#allocation9 + $0x30] sm:$0xf]
        %v1475 = vld [vmem:[#allocation9 + $0x34] sm:$0xf]
        %v1476 = vld [vmem:[#allocation9 + $0x38] sm:$0xf]
        %v1477 = vld [vmem:[#allocation9 + $0x3c] sm:$0xf]
        %v1478 = vld [vmem:[%s4] sm:$0x1]
        %v1480 = vlaneseq
        %v1481 = vshrl.u32 %v1480, 7
        %v1482 = vsub.s32 0, %v1481
        %v1483 = vrot.slane %v1478, %v1482
        %v1501 = vunpack.c.l.b16 %v1462
        %v1502 = vunpack.c.l.b16 %v1463
        %v1503 = vunpack.c.l.b16 %v1464
        %v1504 = vunpack.c.l.b16 %v1465
        %v1505 = vunpack.c.l.b16 %v1466
        %v1506 = vunpack.c.l.b16 %v1467
        %v1507 = vunpack.c.l.b16 %v1468
        %v1508 = vunpack.c.l.b16 %v1469
        %v1509 = vunpack.c.l.b16 %v1470
        %v1510 = vunpack.c.l.b16 %v1471
        %v1511 = vunpack.c.l.b16 %v1472
        %v1512 = vunpack.c.l.b16 %v1473
        %v1513 = vunpack.c.l.b16 %v1474
        %v1514 = vunpack.c.l.b16 %v1475
        %v1515 = vunpack.c.l.b16 %v1476
        %v1516 = vunpack.c.l.b16 %v1477
        %v1517 = vpack.c.b16 %v1502, %v1501
        %v1518 = vpack.c.b16 %v1504, %v1503
        %v1519 = vpack.c.b16 %v1506, %v1505
        %v1520 = vpack.c.b16 %v1508, %v1507
        %v1521 = vpack.c.b16 %v1510, %v1509
        %v1522 = vpack.c.b16 %v1512, %v1511
        %v1523 = vpack.c.b16 %v1514, %v1513
        %v1524 = vpack.c.b16 %v1516, %v1515
        %1533 = vmatprep.subr.bf16.mxu0 0
        %1534 = vmatpush1.bf16.msra.mxu0 %v1517
        %1535 = vmatprep.subr.bf16.mxu0 0
        %1536 = vmatpush1.bf16.msra.mxu0 %v1518
        %1537 = vmatprep.subr.bf16.mxu0 0
        %1538 = vmatpush1.bf16.msra.mxu0 %v1519
        %1539 = vmatprep.subr.bf16.mxu0 0
        %1540 = vmatpush1.bf16.msra.mxu0 %v1520
        %1541 = vmatprep.subr.bf16.mxu0 0
        %1542 = vmatpush1.bf16.msra.mxu0 %v1521
        %1543 = vmatprep.subr.bf16.mxu0 0
        %1544 = vmatpush1.bf16.msra.mxu0 %v1522
        %1545 = vmatprep.subr.bf16.mxu0 0
        %1546 = vmatpush1.bf16.msra.mxu0 %v1523
        %1547 = vmatprep.subr.bf16.mxu0 0
        %1548 = vmatpush1.bf16.msra.mxu0 %v1524
        %1549 = vmatprep.subr.bf16.mxu0 0
        %1550 = vmatpush1.bf16.msra.mxu0 0
        %1551 = vmatprep.subr.bf16.mxu0 0
        %1552 = vmatpush1.bf16.msra.mxu0 0
        %1553 = vmatprep.subr.bf16.mxu0 0
        %1554 = vmatpush1.bf16.msra.mxu0 0
        %1555 = vmatprep.subr.bf16.mxu0 0
        %1556 = vmatpush1.bf16.msra.mxu0 0
        %1557 = vmatprep.subr.bf16.mxu0 0
        %1558 = vmatpush1.bf16.msra.mxu0 0
        %1559 = vmatprep.subr.bf16.mxu0 0
        %1560 = vmatpush1.bf16.msra.mxu0 0
        %1561 = vmatprep.subr.bf16.mxu0 0
        %1562 = vmatpush1.bf16.msra.mxu0 0
        %1563 = vmatprep.subr.bf16.mxu0 0
        %1564 = vmatpush1.bf16.msra.mxu0 0
        %1565 = vmatprep.mubr.bf16.mxu0 0
        %1566 = vmatmul.mubr.bf16.gmra.mrb[0].mxu0 %v1452
        %v1567 = vpop.f32.mrb[0].mxu0
        %v1568 = vadd.f32 %v1483, %v1567
        %v1569 = vpop.f32.mrb[0].mxu0
        %v1570 = vpop.f32.mrb[0].mxu0
        %v1571 = vadd.f32 %v1483, %v1570
        %v1572 = vpop.f32.mrb[0].mxu0
        %1573 = vmatprep.mubr.bf16.mxu0 0
        %1574 = vmatmul.mubr.bf16.gmra.mrb[0].mxu0 %v1453
        %v1575 = vpop.f32.mrb[0].mxu0
        %v1576 = vadd.f32 %v1483, %v1575
        %v1577 = vpop.f32.mrb[0].mxu0
        %v1578 = vpop.f32.mrb[0].mxu0
        %v1579 = vadd.f32 %v1483, %v1578
        %v1580 = vpop.f32.mrb[0].mxu0
        %1581 = vmatprep.mubr.bf16.mxu0 0
        %1582 = vmatmul.mubr.bf16.gmra.mrb[0].mxu0 %v1454
        %v1583 = vpop.f32.mrb[0].mxu0
        %v1584 = vadd.f32 %v1483, %v1583
        %v1585 = vpop.f32.mrb[0].mxu0
        %v1586 = vpop.f32.mrb[0].mxu0
        %v1587 = vadd.f32 %v1483, %v1586
        %v1588 = vpop.f32.mrb[0].mxu0
        %1589 = vmatprep.mubr.bf16.mxu0 0
        %1590 = vmatmul.mubr.bf16.gmra.mrb[0].mxu0 %v1455
        %v1591 = vpop.f32.mrb[0].mxu0
        %v1592 = vadd.f32 %v1483, %v1591
        %v1593 = vpop.f32.mrb[0].mxu0
        %v1594 = vpop.f32.mrb[0].mxu0
        %v1595 = vadd.f32 %v1483, %v1594
        %v1596 = vpop.f32.mrb[0].mxu0
        %1597 = vmatprep.mubr.bf16.mxu0 0
        %1598 = vmatmul.mubr.bf16.gmra.mrb[0].mxu0 %v1456
        %v1599 = vpop.f32.mrb[0].mxu0
        %v1600 = vadd.f32 %v1483, %v1599
        %v1601 = vpop.f32.mrb[0].mxu0
        %v1602 = vpop.f32.mrb[0].mxu0
        %v1603 = vadd.f32 %v1483, %v1602
        %v1604 = vpop.f32.mrb[0].mxu0
        %1605 = vmatprep.mubr.bf16.mxu0 0
        %1606 = vmatmul.mubr.bf16.gmra.mrb[0].mxu0 %v1457
        %v1607 = vpop.f32.mrb[0].mxu0
        %v1608 = vadd.f32 %v1483, %v1607
        %v1609 = vpop.f32.mrb[0].mxu0
        %v1610 = vpop.f32.mrb[0].mxu0
        %v1611 = vadd.f32 %v1483, %v1610
        %v1612 = vpop.f32.mrb[0].mxu0
        %1613 = vmatprep.mubr.bf16.mxu0 0
        %1614 = vmatmul.mubr.bf16.gmra.mrb[0].mxu0 %v1458
        %v1615 = vpop.f32.mrb[0].mxu0
        %v1616 = vadd.f32 %v1483, %v1615
        %v1617 = vpop.f32.mrb[0].mxu0
        %v1618 = vpop.f32.mrb[0].mxu0
        %v1619 = vadd.f32 %v1483, %v1618
        %v1620 = vpop.f32.mrb[0].mxu0
        %1621 = vmatprep.mubr.bf16.mxu0 0
        %1622 = vmatmul.mubr.bf16.gmra.mrb[0].mxu0 %v1459
        %v1623 = vpop.f32.mrb[0].mxu0
        %v1624 = vadd.f32 %v1483, %v1623
        %v1625 = vpop.f32.mrb[0].mxu0
        %v1626 = vpop.f32.mrb[0].mxu0
        %v1627 = vadd.f32 %v1483, %v1626
        %v1628 = vpop.f32.mrb[0].mxu0
        %1629 = vmatprep.mubr.bf16.mxu0 0
        %1630 = vmatmul.mubr.bf16.gmra.mrb[0].mxu0 %v1460
        %v1631 = vpop.f32.mrb[0].mxu0
        %v1632 = vadd.f32 %v1483, %v1631
        %v1633 = vpop.f32.mrb[0].mxu0
        %v1634 = vpop.f32.mrb[0].mxu0
        %v1635 = vadd.f32 %v1483, %v1634
        %v1636 = vpop.f32.mrb[0].mxu0
        %1637 = vmatprep.mubr.bf16.mxu0 0
        %1638 = vmatmul.mubr.bf16.gmra.mrb[0].mxu0 %v1461
        %v1639 = vpop.f32.mrb[0].mxu0
        %v1640 = vadd.f32 %v1483, %v1639
        %v1641 = vpop.f32.mrb[0].mxu0
        %v1642 = vpop.f32.mrb[0].mxu0
        %v1643 = vadd.f32 %v1483, %v1642
        %v1644 = vpop.f32.mrb[0].mxu0
        %1645 = vdwg.mxu0
        %v1646 = vmax.f32 %v1568, 0.0
        %v1647 = vmax.f32 %v1571, 0.0
        %v1648 = vmax.f32 %v1576, 0.0
        %v1649 = vmax.f32 %v1579, 0.0
        %v1650 = vmax.f32 %v1584, 0.0
        %v1651 = vmax.f32 %v1587, 0.0
        %v1652 = vmax.f32 %v1592, 0.0
        %v1653 = vmax.f32 %v1595, 0.0
        %v1654 = vmax.f32 %v1600, 0.0
        %v1655 = vmax.f32 %v1603, 0.0
        %v1656 = vmax.f32 %v1608, 0.0
        %v1657 = vmax.f32 %v1611, 0.0
        %v1658 = vmax.f32 %v1616, 0.0
        %v1659 = vmax.f32 %v1619, 0.0
        %v1660 = vmax.f32 %v1624, 0.0
        %v1661 = vmax.f32 %v1627, 0.0
        %v1662 = vmax.f32 %v1632, 0.0
        %v1663 = vmax.f32 %v1635, 0.0
        %v1664 = vmax.f32 %v1640, 0.0
        %v1665 = vmax.f32 %v1643, 0.0
        %v1666 = vpack.c.bf16 %v1647, %v1646
        %v1667 = vpack.c.bf16 %v1649, %v1648
        %v1668 = vpack.c.bf16 %v1651, %v1650
        %v1669 = vpack.c.bf16 %v1653, %v1652
        %v1670 = vpack.c.bf16 %v1655, %v1654
        %v1671 = vpack.c.bf16 %v1657, %v1656
        %v1672 = vpack.c.bf16 %v1659, %v1658
        %v1673 = vpack.c.bf16 %v1661, %v1660
        %v1674 = vpack.c.bf16 %v1663, %v1662
        %v1675 = vpack.c.bf16 %v1665, %v1664
        %v1676 = vld [vmem:[#allocation10] sm:$0xf]
        %v1677 = vld [vmem:[#allocation10 + $0x4] sm:$0xf]
        %v1678 = vld [vmem:[#allocation10 + $0x8] sm:$0xf]
        %v1679 = vld [vmem:[#allocation10 + $0xc] sm:$0xf]
        %v1680 = vld [vmem:[#allocation10 + $0x10] sm:$0xf]
        %v1681 = vld [vmem:[#allocation10 + $0x14] sm:$0xf]
        %v1682 = vld [vmem:[#allocation10 + $0x18] sm:$0xf]
        %v1683 = vld [vmem:[#allocation10 + $0x1c] sm:$0xf]
        %v1684 = vld [vmem:[#allocation10 + $0x20] sm:$0xf]
        %v1685 = vld [vmem:[#allocation10 + $0x24] sm:$0xf]
        %v1686 = vld [vmem:[#allocation10 + $0x28] sm:$0xf]
        %v1687 = vld [vmem:[#allocation10 + $0x2c] sm:$0xf]
        %v1688 = vld [vmem:[#allocation10 + $0x30] sm:$0xf]
        %v1689 = vld [vmem:[#allocation10 + $0x34] sm:$0xf]
        %v1690 = vld [vmem:[#allocation10 + $0x38] sm:$0xf]
        %v1691 = vld [vmem:[#allocation10 + $0x3c] sm:$0xf]
        %v1692 = vld [vmem:[%s6] sm:$0x1]
        %v1694 = vlaneseq
        %v1695 = vshrl.u32 %v1694, 7
        %v1696 = vsub.s32 0, %v1695
        %v1697 = vrot.slane %v1692, %v1696
        %v1715 = vunpack.c.l.b16 %v1676
        %v1716 = vunpack.c.l.b16 %v1677
        %v1717 = vunpack.c.l.b16 %v1678
        %v1718 = vunpack.c.l.b16 %v1679
        %v1719 = vunpack.c.l.b16 %v1680
        %v1720 = vunpack.c.l.b16 %v1681
        %v1721 = vunpack.c.l.b16 %v1682
        %v1722 = vunpack.c.l.b16 %v1683
        %v1723 = vunpack.c.l.b16 %v1684
        %v1724 = vunpack.c.l.b16 %v1685
        %v1725 = vunpack.c.l.b16 %v1686
        %v1726 = vunpack.c.l.b16 %v1687
        %v1727 = vunpack.c.l.b16 %v1688
        %v1728 = vunpack.c.l.b16 %v1689
        %v1729 = vunpack.c.l.b16 %v1690
        %v1730 = vunpack.c.l.b16 %v1691
        %v1731 = vpack.c.b16 %v1716, %v1715
        %v1732 = vpack.c.b16 %v1718, %v1717
        %v1733 = vpack.c.b16 %v1720, %v1719
        %v1734 = vpack.c.b16 %v1722, %v1721
        %v1735 = vpack.c.b16 %v1724, %v1723
        %v1736 = vpack.c.b16 %v1726, %v1725
        %v1737 = vpack.c.b16 %v1728, %v1727
        %v1738 = vpack.c.b16 %v1730, %v1729
        %1747 = vmatprep.subr.bf16.mxu0 0
        %1748 = vmatpush1.bf16.msra.mxu0 %v1731
        %1749 = vmatprep.subr.bf16.mxu0 0
        %1750 = vmatpush1.bf16.msra.mxu0 %v1732
        %1751 = vmatprep.subr.bf16.mxu0 0
        %1752 = vmatpush1.bf16.msra.mxu0 %v1733
        %1753 = vmatprep.subr.bf16.mxu0 0
        %1754 = vmatpush1.bf16.msra.mxu0 %v1734
        %1755 = vmatprep.subr.bf16.mxu0 0
        %1756 = vmatpush1.bf16.msra.mxu0 %v1735
        %1757 = vmatprep.subr.bf16.mxu0 0
        %1758 = vmatpush1.bf16.msra.mxu0 %v1736
        %1759 = vmatprep.subr.bf16.mxu0 0
        %1760 = vmatpush1.bf16.msra.mxu0 %v1737
        %1761 = vmatprep.subr.bf16.mxu0 0
        %1762 = vmatpush1.bf16.msra.mxu0 %v1738
        %1763 = vmatprep.subr.bf16.mxu0 0
        %1764 = vmatpush1.bf16.msra.mxu0 0
        %1765 = vmatprep.subr.bf16.mxu0 0
        %1766 = vmatpush1.bf16.msra.mxu0 0
        %1767 = vmatprep.subr.bf16.mxu0 0
        %1768 = vmatpush1.bf16.msra.mxu0 0
        %1769 = vmatprep.subr.bf16.mxu0 0
        %1770 = vmatpush1.bf16.msra.mxu0 0
        %1771 = vmatprep.subr.bf16.mxu0 0
        %1772 = vmatpush1.bf16.msra.mxu0 0
        %1773 = vmatprep.subr.bf16.mxu0 0
        %1774 = vmatpush1.bf16.msra.mxu0 0
        %1775 = vmatprep.subr.bf16.mxu0 0
        %1776 = vmatpush1.bf16.msra.mxu0 0
        %1777 = vmatprep.subr.bf16.mxu0 0
        %1778 = vmatpush1.bf16.msra.mxu0 0
        %1779 = vmatprep.mubr.bf16.mxu0 0
        %1780 = vmatmul.mubr.bf16.gmra.mrb[0].mxu0 %v1666
        %v1781 = vpop.f32.mrb[0].mxu0
        %v1782 = vadd.f32 %v1697, %v1781
        %v1783 = vpop.f32.mrb[0].mxu0
        %v1784 = vpop.f32.mrb[0].mxu0
        %v1785 = vadd.f32 %v1697, %v1784
        %v1786 = vpop.f32.mrb[0].mxu0
        %1787 = vmatprep.mubr.bf16.mxu0 0
        %1788 = vmatmul.mubr.bf16.gmra.mrb[0].mxu0 %v1667
        %v1789 = vpop.f32.mrb[0].mxu0
        %v1790 = vadd.f32 %v1697, %v1789
        %v1791 = vpop.f32.mrb[0].mxu0
        %v1792 = vpop.f32.mrb[0].mxu0
        %v1793 = vadd.f32 %v1697, %v1792
        %v1794 = vpop.f32.mrb[0].mxu0
        %1795 = vmatprep.mubr.bf16.mxu0 0
        %1796 = vmatmul.mubr.bf16.gmra.mrb[0].mxu0 %v1668
        %v1797 = vpop.f32.mrb[0].mxu0
        %v1798 = vadd.f32 %v1697, %v1797
        %v1799 = vpop.f32.mrb[0].mxu0
        %v1800 = vpop.f32.mrb[0].mxu0
        %v1801 = vadd.f32 %v1697, %v1800
        %v1802 = vpop.f32.mrb[0].mxu0
        %1803 = vmatprep.mubr.bf16.mxu0 0
        %1804 = vmatmul.mubr.bf16.gmra.mrb[0].mxu0 %v1669
        %v1805 = vpop.f32.mrb[0].mxu0
        %v1806 = vadd.f32 %v1697, %v1805
        %v1807 = vpop.f32.mrb[0].mxu0
        %v1808 = vpop.f32.mrb[0].mxu0
        %v1809 = vadd.f32 %v1697, %v1808
        %v1810 = vpop.f32.mrb[0].mxu0
        %1811 = vmatprep.mubr.bf16.mxu0 0
        %1812 = vmatmul.mubr.bf16.gmra.mrb[0].mxu0 %v1670
        %v1813 = vpop.f32.mrb[0].mxu0
        %v1814 = vadd.f32 %v1697, %v1813
        %v1815 = vpop.f32.mrb[0].mxu0
        %v1816 = vpop.f32.mrb[0].mxu0
        %v1817 = vadd.f32 %v1697, %v1816
        %v1818 = vpop.f32.mrb[0].mxu0
        %1819 = vmatprep.mubr.bf16.mxu0 0
        %1820 = vmatmul.mubr.bf16.gmra.mrb[0].mxu0 %v1671
        %v1821 = vpop.f32.mrb[0].mxu0
        %v1822 = vadd.f32 %v1697, %v1821
        %v1823 = vpop.f32.mrb[0].mxu0
        %v1824 = vpop.f32.mrb[0].mxu0
        %v1825 = vadd.f32 %v1697, %v1824
        %v1826 = vpop.f32.mrb[0].mxu0
        %1827 = vmatprep.mubr.bf16.mxu0 0
        %1828 = vmatmul.mubr.bf16.gmra.mrb[0].mxu0 %v1672
        %v1829 = vpop.f32.mrb[0].mxu0
        %v1830 = vadd.f32 %v1697, %v1829
        %v1831 = vpop.f32.mrb[0].mxu0
        %v1832 = vpop.f32.mrb[0].mxu0
        %v1833 = vadd.f32 %v1697, %v1832
        %v1834 = vpop.f32.mrb[0].mxu0
        %1835 = vmatprep.mubr.bf16.mxu0 0
        %1836 = vmatmul.mubr.bf16.gmra.mrb[0].mxu0 %v1673
        %v1837 = vpop.f32.mrb[0].mxu0
        %v1838 = vadd.f32 %v1697, %v1837
        %v1839 = vpop.f32.mrb[0].mxu0
        %v1840 = vpop.f32.mrb[0].mxu0
        %v1841 = vadd.f32 %v1697, %v1840
        %v1842 = vpop.f32.mrb[0].mxu0
        %1843 = vmatprep.mubr.bf16.mxu0 0
        %1844 = vmatmul.mubr.bf16.gmra.mrb[0].mxu0 %v1674
        %v1845 = vpop.f32.mrb[0].mxu0
        %v1846 = vadd.f32 %v1697, %v1845
        %v1847 = vpop.f32.mrb[0].mxu0
        %v1848 = vpop.f32.mrb[0].mxu0
        %v1849 = vadd.f32 %v1697, %v1848
        %v1850 = vpop.f32.mrb[0].mxu0
        %1851 = vmatprep.mubr.bf16.mxu0 0
        %1852 = vmatmul.mubr.bf16.gmra.mrb[0].mxu0 %v1675
        %v1853 = vpop.f32.mrb[0].mxu0
        %v1854 = vadd.f32 %v1697, %v1853
        %v1855 = vpop.f32.mrb[0].mxu0
        %v1856 = vpop.f32.mrb[0].mxu0
        %v1857 = vadd.f32 %v1697, %v1856
        %v1858 = vpop.f32.mrb[0].mxu0
        %1859 = vdwg.mxu0
        %1860 = vst [vmem:[%s406] sm:$0xff] %v1782
        %1861 = vst [vmem:[%s406 + $0x8] sm:$0xff] %v1785
        %1862 = vst [vmem:[%s406 + $0x10] sm:$0xff] %v1790
        %1863 = vst [vmem:[%s406 + $0x18] sm:$0xff] %v1793
        %1864 = vst [vmem:[%s406 + $0x20] sm:$0xff] %v1798
        %1865 = vst [vmem:[%s406 + $0x28] sm:$0xff] %v1801
        %1866 = vst [vmem:[%s406 + $0x30] sm:$0xff] %v1806
        %1867 = vst [vmem:[%s406 + $0x38] sm:$0xff] %v1809
        %1868 = vst [vmem:[%s406 + $0x40] sm:$0xff] %v1814
        %1869 = vst [vmem:[%s406 + $0x48] sm:$0xff] %v1817
        %1870 = vst [vmem:[%s406 + $0x50] sm:$0xff] %v1822
        %1871 = vst [vmem:[%s406 + $0x58] sm:$0xff] %v1825
        %1872 = vst [vmem:[%s406 + $0x60] sm:$0xff] %v1830
        %1873 = vst [vmem:[%s406 + $0x68] sm:$0xff] %v1833
        %1874 = vst [vmem:[%s406 + $0x70] sm:$0xff] %v1838
        %1875 = vst [vmem:[%s406 + $0x78] sm:$0xff] %v1841
        %1876 = vst [vmem:[%s406 + $0x80] sm:$0xff] %v1846
        %1877 = vst [vmem:[%s406 + $0x88] sm:$0xff] %v1849
        %1878 = vst [vmem:[%s406 + $0x90] sm:$0xff] %v1854
        %1879 = vst [vmem:[%s406 + $0x98] sm:$0xff] %v1857
        %s1880 = sand.u32 %s214, 1
        %s1881 = scalar_lea.sflag [#allocation5], %s1880
        %s1882 = sand.u32 %s214, 1
        %s1883 = smul.addr %s1882, 160
        %s1884 = scalar_lea.vmem [#allocation12], %s1883
        // Predicated region
        $region73: #{tpu_custom_call.1} parent=51 // pred_check
          %p1885 = pneg %p224
        $region74: #{tpu_custom_call.1} parent=51 // pred_check_branch
          %1887 = sbr.rel (%p1885) target = $region76
        $region75: #{tpu_custom_call.1} parent=51 // pred_region
          %s1888 = smul.u32 20, %s28
          %s1890 = ssub.s32 2560, 2560
          %1891 = vsyncadd %s1881, %s1890
          %s1892 = smul.addr %s1888, 128
          %s1893 = scalar_lea.hbm %s8, %s1892
          %s1894 = sshll.u32 %s1884, 4
          %s1895 = int_to_ptr.vmem [resolvable:$true] %s1894
          %1900 = dma.vmem_to_hbm [thread:$0]  %s1895, 2560, %s1893, %s1881, 128, 128, 8
        $region76: #{tpu_custom_call.1} parent=51 // pred_fallthru
          _
      $region52: #{tpu_custom_call.1} parent=5 // pred_fallthru
        _
      %p1901 = scmp.le.s32.totalorder 2, %s23
      // Predicated region
      $region77: #{tpu_custom_call.1} parent=5 // pred_check
        %p1902 = pneg %p1901
      $region78: #{tpu_custom_call.1} parent=5 // pred_check_branch
        %1904 = sbr.rel (%p1902) target = $region80
      $region79: #{tpu_custom_call.1} parent=5 // pred_region
        %s1905 = ssub.s32 %s23, 2
        // Predicated region
        $region81: #{tpu_custom_call.1} parent=79 // pred_check
          %p1906 = pneg %p230
        $region82: #{tpu_custom_call.1} parent=79 // pred_check_branch
          %1908 = sbr.rel (%p1906) target = $region84
        $region83: #{tpu_custom_call.1} parent=79 // pred_region
          %s1909 = sand.u32 %s215, 1
          %s1910 = scalar_lea.sflag [#allocation5], %s1909
          %s1911 = sand.u32 %s215, 1
          %s1912 = smul.addr %s1911, 160
          %s1913 = scalar_lea.vmem [#allocation12], %s1912
          %1914 = dma.done %s1910, 2560
        $region84: #{tpu_custom_call.1} parent=79 // pred_fallthru
          _
      $region80: #{tpu_custom_call.1} parent=5 // pred_fallthru
        _
    $region6: #{tpu_custom_call.1} parent=1 // loop_footer
      %s27 = sadd.s32 1, %s23
    $region7: #{tpu_custom_call.1} parent=1 // loop_footer_branch
      %22 = sbr.rel target = $region3
    $region8: #{tpu_custom_call.1} parent=1 // loop_exit
      _
    %1915 = vsyncpa [#allocation4], 1
    %s1916 = scalar_lea.sflag [#allocation4], 1
    %1917 = vsyncpa %s1916, 1
    %1918 = vsyncpa [#allocation7], 1
    %1919 = vsyncpa [#allocation11], 1
    %1920 = vsyncpa [#allocation5], 1
    %s1921 = scalar_lea.sflag [#allocation5], 1
    %1922 = vsyncpa %s1921, 1

</llo_original>
